<compile_context>
chip_gen: v5e
topology: v5e:2x2
jax: 0.10.0
libtpu: 0.0.40
codegen_flags: <defaults>
</compile_context>

<pallas_src>
import functools
import math

import jax
import jax.numpy as jnp
from jax.experimental import pallas as pl
from jax.experimental.pallas import tpu as pltpu

_LANE = 128


def _attn_kernel(q_in_ref, ctx_ref, cov_ref, mask_ref,
                 wq_wT_ref, wq_b_ref, wk_wT_ref, kv1_ref, kv2_ref,
                 wctx_ref, attn_ref, score_ref, *, chain_dtype):
    TB, Lp, twoD = ctx_ref.shape
    D = wq_wT_ref.shape[1]
    inv_scale = jnp.float32(1.0 / math.sqrt(float(D)))

    # ---- Query projection: tiny (TB, 2D) x (2D, D) matmul; bf16 operands, f32 acc.
    q = jnp.tanh(
        jnp.dot(q_in_ref[...], wq_wT_ref[...], preferred_element_type=jnp.float32)
        + wq_b_ref[...]
    )
    qs = q * inv_scale                                            # (TB, D) f32

    # ---- K projection: the only MXU work. ctx is cast to bf16 for this phase only
    # (its lifetime ends at the matmul); Lp % 8 == 0 so the reshape is
    # layout-preserving (no relayout copy). Coverage's rank-1 feature projection is
    # pre-folded through Wk (kv1/kv2), so no (TB, L, 2D) word_feature is built.
    k_lin = jnp.dot(
        ctx_ref[...].astype(jnp.bfloat16).reshape(TB * Lp, twoD),
        wk_wT_ref[...],
        preferred_element_type=jnp.float32,
    ).reshape(TB, Lp, D)

    # ---- K elementwise chain (adds + rank-1 coverage correction + tanh).
    # chain_dtype is bf16 on v6e/v7x (bf16 VPU/EUP), f32 on v5e / unknown.
    # NOTE: cov[:, :, None] moves Lp from lanes to sublanes — one O(TB*Lp) XLU
    # relayout, D x smaller than the adjacent elementwise/tanh work.
    cov = cov_ref[...].astype(chain_dtype)                        # (TB, Lp)
    k = jnp.tanh(
        k_lin.astype(chain_dtype)
        + cov[:, :, None] * kv1_ref[...].astype(chain_dtype).reshape(1, 1, D)
        + kv2_ref[...].astype(chain_dtype).reshape(1, 1, D)
    )                                                             # (TB, Lp, D)

    # ---- score = (Q/scale) . K : M=1 contraction kept OFF the MXU
    # (VPU broadcast-mul + XLU cross-lane reduce; both units have slack here).
    score = jnp.sum(qs[:, None, :] * k, axis=-1)                  # (TB, Lp) f32
    score = jnp.where(mask_ref[...] == 0, jnp.float32(-1e18), score)
    score_ref[...] = score                                        # lane-dense (Lp % 128 == 0)

    # ---- softmax over the (padded) sequence axis; approx reciprocal -> EUP vrcp.
    # Padded / masked columns sit at -1e18 and underflow to exactly 0 after exp.
    m = jnp.max(score, axis=1, keepdims=True)
    e = jnp.exp(score - m)
    attn = e * pl.reciprocal(jnp.sum(e, axis=1, keepdims=True), approx=True)
    attn_ref[...] = attn

    # ---- weighted_context = sum_l attn * ctx : also off the MXU (VPU mul + XLU
    # sublane reduce). ctx_ref is re-read here (f32) so no full-size cast copy of it
    # stays live across the whole kernel body; accumulation is f32.
    wctx_ref[...] = jnp.sum(
        attn[:, :, None] * ctx_ref[...].astype(jnp.float32), axis=1
    )                                                             # (TB, 2D) f32


def _tpu_generation():
    try:
        kind = jax.devices()[0].device_kind.lower()
    except Exception:
        return 0
    for gen in (7, 6, 5, 4):
        if f"v{gen}" in kind:
            return gen
    return 0


def _vmem_capacity_bytes():
    try:
        return int(pltpu.get_tpu_info().vmem_capacity_bytes)
    except Exception:
        return 64 * 1024 * 1024          # conservative v7x-sized fallback


def _vmem_budgets():
    """Generation-aware (limit, tile-budget): ~96/64 MiB on v5e/v6e, ~48/32 MiB on v7x."""
    cap = _vmem_capacity_bytes()
    vmem_limit = max(32 * 1024 * 1024, min(cap * 3 // 4, 96 * 1024 * 1024))
    tile_budget = vmem_limit * 2 // 3
    return vmem_limit, tile_budget


def _pick_batch_tile(B, Lp, twoD, D, ctx_itemsize, chain_itemsize, budget_bytes):
    """Largest multiple-of-8 batch tile whose full working set — double-buffered
    inputs AND outputs plus the per-phase K / score / weighted-context temporaries —
    fits within the per-generation VMEM tile budget."""
    def working_set(tb):
        io = tb * (
            2 * Lp * twoD * ctx_itemsize          # context input blocks (x2 pipeline buffers)
            + 2 * (Lp * 4 + Lp * 4 + twoD * 2)    # coverage f32 + mask i32 + q_in bf16 (x2)
            + 2 * (twoD * 4 + 2 * Lp * 4)         # wctx + attn + score output blocks (x2)
        )
        phase_k = tb * Lp * (twoD * 2             # bf16 ctx cast feeding the K matmul
                             + D * 4              # k_lin f32 accumulator
                             + D * chain_itemsize # k
                             + D * 4)             # qs*k f32 product before the lane reduce
        phase_wctx = tb * Lp * twoD * 4           # attn*ctx f32 product before the sublane reduce
        return io + max(phase_k, phase_wctx)

    if B <= 8:
        return B
    tb = 8
    while tb * 2 <= B and working_set(tb * 2) <= budget_bytes:
        tb *= 2
    return tb


def scaled_dot_product_attention(state, context, coverage, padding_mask, params):
    """Pallas-backed forward. Returns (weighted_context, attention, coverage, score)."""
    hidden_state, cell_state = state
    B, L, twoD = context.shape
    D = twoD // 2

    gen = _tpu_generation()
    # bf16 elementwise/tanh chain only where the VPU/EUP support it (v6e/v7x).
    chain_dtype = jnp.bfloat16 if gen >= 6 else jnp.float32

    # Query input (tiny): concatenated hidden/cell state, shipped as a bf16 MXU operand.
    q_in = jnp.concatenate(
        [hidden_state.reshape(-1, D), cell_state.reshape(-1, D)], axis=1
    ).astype(jnp.bfloat16)                                        # (B, 2D)

    # Weight prep: transpose once, fold the rank-1 coverage projection through Wk:
    #   K = tanh(ctx @ Wk^T + cov * (covp_w @ Wk^T) + (covp_b @ Wk^T + bk))
    # MXU operands go in bf16; accumulation stays f32 inside the kernel.
    wq_wT = params["wq_w"].T.astype(jnp.bfloat16)                 # (2D, D)
    wq_b = params["wq_b"].reshape(1, D).astype(jnp.float32)
    wk_wT_f32 = params["wk_w"].T.astype(jnp.float32)              # (2D, D)
    covp_w_vec = params["coverage_proj_w"].reshape(-1).astype(jnp.float32)   # (2D,)
    covp_b_vec = params["coverage_proj_b"].reshape(-1).astype(jnp.float32)   # (2D,)
    kv1 = (covp_w_vec @ wk_wT_f32).reshape(1, D).astype(jnp.bfloat16)
    kv2 = (covp_b_vec @ wk_wT_f32
           + params["wk_b"].astype(jnp.float32)).reshape(1, D).astype(jnp.bfloat16)
    wk_wT = wk_wT_f32.astype(jnp.bfloat16)

    # Exact integer mask (cheap, safer than f32 == 0 compares on the hot path).
    mask_i32 = (padding_mask != 0).astype(jnp.int32)              # (B, L)

    # Pad the sequence axis to a lane multiple so score/attention/mask blocks are
    # lane-dense (unmasked vst) and the in-kernel reshape is layout-preserving.
    # Padded positions carry mask = 0 and zero context -> zero attention weight.
    # (Edge case: a *fully* masked row becomes uniform over Lp instead of L — same
    #  degenerate behavior class as the reference, documented as intentional.)
    Lp = ((L + _LANE - 1) // _LANE) * _LANE
    if Lp != L:
        pad = Lp - L
        context_p = jnp.pad(context, ((0, 0), (0, pad), (0, 0)))
        coverage_p = jnp.pad(coverage.astype(jnp.float32), ((0, 0), (0, pad)))
        mask_p = jnp.pad(mask_i32, ((0, 0), (0, pad)))
    else:
        context_p = context
        coverage_p = coverage.astype(jnp.float32)
        mask_p = mask_i32

    vmem_limit, tile_budget = _vmem_budgets()
    # Resident weights are double-buffered by the default pipeliner — charge them.
    weight_bytes = 2 * (2 * twoD * D * 2 + D * 4 + 2 * D * 2)
    TB = _pick_batch_tile(
        B, Lp, twoD, D,
        jnp.dtype(context_p.dtype).itemsize,
        jnp.dtype(chain_dtype).itemsize,
        max(tile_budget - weight_bytes, 4 * 1024 * 1024),
    )
    nb = pl.cdiv(B, TB)

    row2 = lambda b: (b, 0)
    row3 = lambda b: (b, 0, 0)
    resident = lambda b: (0, 0)     # block index never changes -> stays VMEM-resident

    kernel = functools.partial(_attn_kernel, chain_dtype=chain_dtype)

    wctx, attn_p, score_p = pl.pallas_call(
        kernel,
        out_shape=(
            jax.ShapeDtypeStruct((B, twoD), jnp.float32),
            jax.ShapeDtypeStruct((B, Lp), jnp.float32),
            jax.ShapeDtypeStruct((B, Lp), jnp.float32),
        ),
        grid=(nb,),
        in_specs=[
            pl.BlockSpec((TB, twoD), row2),        # q_in (bf16)
            pl.BlockSpec((TB, Lp, twoD), row3),    # context (caller dtype)
            pl.BlockSpec((TB, Lp), row2),          # coverage (f32)
            pl.BlockSpec((TB, Lp), row2),          # padding mask (int32)
            pl.BlockSpec((twoD, D), resident),     # Wq^T (bf16)
            pl.BlockSpec((1, D), resident),        # bq (f32)
            pl.BlockSpec((twoD, D), resident),     # Wk^T (bf16)
            pl.BlockSpec((1, D), resident),        # kv1 = covp_w @ Wk^T (bf16)
            pl.BlockSpec((1, D), resident),        # kv2 = covp_b @ Wk^T + bk (bf16)
        ],
        out_specs=(
            pl.BlockSpec((TB, twoD), row2),        # weighted context
            pl.BlockSpec((TB, Lp), row2),          # attention (lane-dense)
            pl.BlockSpec((TB, Lp), row2),          # score (lane-dense)
        ),
        compiler_params=pltpu.CompilerParams(
            dimension_semantics=("parallel",),
            vmem_limit_bytes=vmem_limit,
        ),
    )(q_in, context_p, coverage_p, mask_p, wq_wT, wq_b, wk_wT, kv1, kv2)

    weighted_context = wctx.reshape(B, 1, twoD)
    return weighted_context, attn_p[:, :L], coverage, score_p[:, :L]


def _reference(state, context, coverage, padding_mask, params):
    """Pure-JAX f32 reference mirroring the PyTorch forward, for a sanity check."""
    hidden_state, cell_state = state
    B, L, twoD = context.shape
    D = twoD // 2
    query = jnp.concatenate(
        [hidden_state.reshape(-1, D), cell_state.reshape(-1, D)], axis=1
    )
    Q = jnp.tanh(query @ params["wq_w"].T + params["wq_b"])
    word_feature = context + (
        coverage[..., None] @ params["coverage_proj_w"].T + params["coverage_proj_b"]
    )
    K = jnp.tanh(word_feature @ params["wk_w"].T + params["wk_b"])
    Qs = Q.reshape(B, 1, D) / math.sqrt(float(D))
    score = jnp.sum(Qs * K, axis=2)
    score = jnp.where(padding_mask == 0, -1e18, score)
    attention = jax.nn.softmax(score, axis=1)
    weighted_context = jnp.einsum("bl,bld->bd", attention, context).reshape(B, 1, twoD)
    return weighted_context, attention, coverage, score


if __name__ == "__main__":
    B, L, D = 2, 8, 32          # batch, seq (input_length), vector_dim
    twoD = 2 * D

    key = jax.random.PRNGKey(0)
    keys = jax.random.split(key, 10)

    # deterministic synthetic parameters (nn.Linear: weight (out, in), bias (out,))
    params = {
        "wq_w": 0.1 * jax.random.normal(keys[0], (D, twoD), jnp.float32),
        "wq_b": 0.1 * jax.random.normal(keys[1], (D,), jnp.float32),
        "coverage_proj_w": 0.1 * jax.random.normal(keys[2], (twoD, 1), jnp.float32),
        "coverage_proj_b": 0.1 * jax.random.normal(keys[3], (twoD,), jnp.float32),
        "wk_w": 0.1 * jax.random.normal(keys[4], (D, twoD), jnp.float32),
        "wk_b": 0.1 * jax.random.normal(keys[5], (D,), jnp.float32),
    }

    hidden_state = jax.random.normal(keys[6], (1, B, D), jnp.float32)
    cell_state = jax.random.normal(keys[7], (1, B, D), jnp.float32)
    context = jax.random.normal(keys[8], (B, L, twoD), jnp.float32)
    coverage = jax.random.uniform(keys[9], (B, L), jnp.float32)
    # padding mask: 1 = valid token, 0 = pad (last 3 positions of second example padded)
    padding_mask = jnp.ones((B, L), jnp.float32).at[1, L - 3:].set(0.0)

    out = scaled_dot_product_attention(
        (hidden_state, cell_state), context, coverage, padding_mask, params
    )
    jax.block_until_ready(out)

    ref = _reference(
        (hidden_state, cell_state), context, coverage, padding_mask, params
    )
    # Tolerance reflects bf16 MXU operands / bf16 tanh chain (f32 accumulation) and
    # the approximate EUP reciprocal in the softmax; observed error is ~1e-3 level.
    for got, want in zip(out, ref):
        assert jnp.allclose(got, want, atol=3e-2, rtol=3e-2), "mismatch vs reference"

    print("KERNEL_OK")
</pallas_src>

<mosaic_0001>
module attributes {stable_mosaic.version = 11 : i64} {
  func.func @_attn_kernel(%arg0: i32, %arg1: memref<2x64xbf16, #tpu.memory_space<vmem>>, %arg2: memref<2x128x64xf32, #tpu.memory_space<vmem>>, %arg3: memref<2x128xf32, #tpu.memory_space<vmem>>, %arg4: memref<2x128xi32, #tpu.memory_space<vmem>>, %arg5: memref<64x32xbf16, #tpu.memory_space<vmem>>, %arg6: memref<1x32xf32, #tpu.memory_space<vmem>>, %arg7: memref<64x32xbf16, #tpu.memory_space<vmem>>, %arg8: memref<1x32xbf16, #tpu.memory_space<vmem>>, %arg9: memref<1x32xbf16, #tpu.memory_space<vmem>>, %arg10: memref<2x64xf32, #tpu.memory_space<vmem>>, %arg11: memref<2x128xf32, #tpu.memory_space<vmem>>, %arg12: memref<2x128xf32, #tpu.memory_space<vmem>>) attributes {dimension_semantics = [#tpu.dimension_semantics<parallel>], iteration_bounds = array<i64: 1>, scalar_prefetch = 0 : i64, scratch_operands = 0 : i64, tpu.core_type = #tpu.core_type<tc>, window_params = [{transform_indices = @transform_0, window_bounds = array<i64: 2, 64>}, {transform_indices = @transform_1, window_bounds = array<i64: 2, 128, 64>}, {transform_indices = @transform_2, window_bounds = array<i64: 2, 128>}, {transform_indices = @transform_3, window_bounds = array<i64: 2, 128>}, {pipeline_mode = #tpu.pipeline_mode<synchronous>, transform_indices = @transform_4, window_bounds = array<i64: 64, 32>}, {pipeline_mode = #tpu.pipeline_mode<synchronous>, transform_indices = @transform_5, window_bounds = array<i64: 1, 32>}, {pipeline_mode = #tpu.pipeline_mode<synchronous>, transform_indices = @transform_6, window_bounds = array<i64: 64, 32>}, {pipeline_mode = #tpu.pipeline_mode<synchronous>, transform_indices = @transform_7, window_bounds = array<i64: 1, 32>}, {pipeline_mode = #tpu.pipeline_mode<synchronous>, transform_indices = @transform_8, window_bounds = array<i64: 1, 32>}, {transform_indices = @transform_9, window_bounds = array<i64: 2, 64>}, {transform_indices = @transform_10, window_bounds = array<i64: 2, 128>}, {transform_indices = @transform_11, window_bounds = array<i64: 2, 128>}]} {
    %c0 = arith.constant 0 : index
    %c0_0 = arith.constant 0 : index
    %0 = vector.load %arg1[%c0, %c0_0] : memref<2x64xbf16, #tpu.memory_space<vmem>>, vector<2x64xbf16>
    %c0_1 = arith.constant 0 : index
    %c0_2 = arith.constant 0 : index
    %1 = vector.load %arg5[%c0_1, %c0_2] : memref<64x32xbf16, #tpu.memory_space<vmem>>, vector<64x32xbf16>
    %cst = arith.constant dense<0.000000e+00> : vector<2x32xf32>
    %2 = tpu.matmul %0, %1, %cst {dimension_numbers = #tpu.dot_dimension_numbers<[1], [0], [0], [1], [0, 0, 1, 1], [], []>} : vector<2x64xbf16>, vector<64x32xbf16>, vector<2x32xf32> -> vector<2x32xf32>
    %c0_3 = arith.constant 0 : index
    %c0_4 = arith.constant 0 : index
    %3 = vector.load %arg6[%c0_3, %c0_4] : memref<1x32xf32, #tpu.memory_space<vmem>>, vector<1x32xf32>
    %4 = vector.broadcast %3 : vector<1x32xf32> to vector<2x32xf32>
    %5 = arith.addf %2, %4 : vector<2x32xf32>
    %6 = math.tanh %5 : vector<2x32xf32>
    %cst_5 = arith.constant 0.176776692 : f32
    %7 = vector.broadcast %cst_5 : f32 to vector<2x32xf32>
    %8 = arith.mulf %6, %7 : vector<2x32xf32>
    %c0_6 = arith.constant 0 : index
    %c0_7 = arith.constant 0 : index
    %c0_8 = arith.constant 0 : index
    %9 = vector.load %arg2[%c0_6, %c0_7, %c0_8] : memref<2x128x64xf32, #tpu.memory_space<vmem>>, vector<2x128x64xf32>
    %10 = arith.truncf %9 : vector<2x128x64xf32> to vector<2x128x64xbf16>
    %11 = vector.shape_cast %10 : vector<2x128x64xbf16> to vector<256x64xbf16>
    %c0_9 = arith.constant 0 : index
    %c0_10 = arith.constant 0 : index
    %12 = vector.load %arg7[%c0_9, %c0_10] : memref<64x32xbf16, #tpu.memory_space<vmem>>, vector<64x32xbf16>
    %cst_11 = arith.constant dense<0.000000e+00> : vector<256x32xf32>
    %13 = tpu.matmul %11, %12, %cst_11 {dimension_numbers = #tpu.dot_dimension_numbers<[1], [0], [0], [1], [0, 0, 1, 1], [], []>} : vector<256x64xbf16>, vector<64x32xbf16>, vector<256x32xf32> -> vector<256x32xf32>
    %14 = vector.shape_cast %13 : vector<256x32xf32> to vector<2x128x32xf32>
    %c0_12 = arith.constant 0 : index
    %c0_13 = arith.constant 0 : index
    %15 = vector.load %arg3[%c0_12, %c0_13] : memref<2x128xf32, #tpu.memory_space<vmem>>, vector<2x128xf32>
    %16 = vector.shape_cast %15 : vector<2x128xf32> to vector<2x128x1xf32>
    %c0_14 = arith.constant 0 : index
    %c0_15 = arith.constant 0 : index
    %17 = vector.load %arg8[%c0_14, %c0_15] : memref<1x32xbf16, #tpu.memory_space<vmem>>, vector<1x32xbf16>
    %18 = arith.extf %17 : vector<1x32xbf16> to vector<1x32xf32>
    %19 = vector.shape_cast %18 : vector<1x32xf32> to vector<1x1x32xf32>
    %20 = vector.broadcast %16 : vector<2x128x1xf32> to vector<2x128x32xf32>
    %21 = vector.broadcast %19 : vector<1x1x32xf32> to vector<2x128x32xf32>
    %22 = arith.mulf %20, %21 : vector<2x128x32xf32>
    %23 = arith.addf %14, %22 : vector<2x128x32xf32>
    %c0_16 = arith.constant 0 : index
    %c0_17 = arith.constant 0 : index
    %24 = vector.load %arg9[%c0_16, %c0_17] : memref<1x32xbf16, #tpu.memory_space<vmem>>, vector<1x32xbf16>
    %25 = arith.extf %24 : vector<1x32xbf16> to vector<1x32xf32>
    %26 = vector.shape_cast %25 : vector<1x32xf32> to vector<1x1x32xf32>
    %27 = vector.broadcast %26 : vector<1x1x32xf32> to vector<2x128x32xf32>
    %28 = arith.addf %23, %27 : vector<2x128x32xf32>
    %29 = math.tanh %28 : vector<2x128x32xf32>
    %30 = vector.shape_cast %8 : vector<2x32xf32> to vector<2x1x32xf32>
    %31 = vector.broadcast %30 : vector<2x1x32xf32> to vector<2x128x32xf32>
    %32 = arith.mulf %31, %29 : vector<2x128x32xf32>
    %cst_18 = arith.constant dense<0.000000e+00> : vector<2x128xf32>
    %33 = vector.multi_reduction <add>, %32, %cst_18 [2] : vector<2x128x32xf32> to vector<2x128xf32>
    %c0_19 = arith.constant 0 : index
    %c0_20 = arith.constant 0 : index
    %34 = vector.load %arg4[%c0_19, %c0_20] : memref<2x128xi32, #tpu.memory_space<vmem>>, vector<2x128xi32>
    %c0_i32 = arith.constant 0 : i32
    %35 = vector.broadcast %c0_i32 : i32 to vector<2x128xi32>
    %36 = arith.cmpi eq, %34, %35 : vector<2x128xi32>
    %cst_21 = arith.constant -9.99999984E+17 : f32
    %37 = vector.broadcast %cst_21 : f32 to vector<2x128xf32>
    %38 = arith.select %36, %37, %33 : vector<2x128xi1>, vector<2x128xf32>
    %c0_22 = arith.constant 0 : index
    %c0_23 = arith.constant 0 : index
    %39 = vector.load %arg12[%c0_22, %c0_23] : memref<2x128xf32, #tpu.memory_space<vmem>>, vector<2x128xf32>
    tpu.vector_store %arg12[%c0_22, %c0_23], %38 {strides = array<i32>} : memref<2x128xf32, #tpu.memory_space<vmem>>, vector<2x128xf32>,
    %cst_24 = arith.constant dense<0xFF800000> : vector<2xf32>
    %40 = vector.multi_reduction <maximumf>, %38, %cst_24 [1] : vector<2x128xf32> to vector<2xf32>
    %41 = vector.shape_cast %40 : vector<2xf32> to vector<2x1xf32>
    %42 = vector.broadcast %41 : vector<2x1xf32> to vector<2x128xf32>
    %43 = arith.subf %38, %42 : vector<2x128xf32>
    %44 = math.exp %43 : vector<2x128xf32>
    %cst_25 = arith.constant dense<0.000000e+00> : vector<2xf32>
    %45 = vector.multi_reduction <add>, %44, %cst_25 [1] : vector<2x128xf32> to vector<2xf32>
    %46 = vector.shape_cast %45 : vector<2xf32> to vector<2x1xf32>
    %47 = tpu.reciprocal %46 {approx = true} : vector<2x1xf32> -> vector<2x1xf32>
    %48 = vector.broadcast %47 : vector<2x1xf32> to vector<2x128xf32>
    %49 = arith.mulf %44, %48 : vector<2x128xf32>
    %c0_26 = arith.constant 0 : index
    %c0_27 = arith.constant 0 : index
    %50 = vector.load %arg11[%c0_26, %c0_27] : memref<2x128xf32, #tpu.memory_space<vmem>>, vector<2x128xf32>
    tpu.vector_store %arg11[%c0_26, %c0_27], %49 {strides = array<i32>} : memref<2x128xf32, #tpu.memory_space<vmem>>, vector<2x128xf32>,
    %51 = vector.shape_cast %49 : vector<2x128xf32> to vector<2x128x1xf32>
    %c0_28 = arith.constant 0 : index
    %c0_29 = arith.constant 0 : index
    %c0_30 = arith.constant 0 : index
    %52 = vector.load %arg2[%c0_28, %c0_29, %c0_30] : memref<2x128x64xf32, #tpu.memory_space<vmem>>, vector<2x128x64xf32>
    %53 = vector.broadcast %51 : vector<2x128x1xf32> to vector<2x128x64xf32>
    %54 = arith.mulf %53, %52 : vector<2x128x64xf32>
    %cst_31 = arith.constant dense<0.000000e+00> : vector<2x64xf32>
    %55 = vector.multi_reduction <add>, %54, %cst_31 [1] : vector<2x128x64xf32> to vector<2x64xf32>
    %c0_32 = arith.constant 0 : index
    %c0_33 = arith.constant 0 : index
    %56 = vector.load %arg10[%c0_32, %c0_33] : memref<2x64xf32, #tpu.memory_space<vmem>>, vector<2x64xf32>
    tpu.vector_store %arg10[%c0_32, %c0_33], %55 {strides = array<i32>} : memref<2x64xf32, #tpu.memory_space<vmem>>, vector<2x64xf32>,
    return
  }
  func.func @transform_0(%arg0: i32) -> (i32, i32) {
    %c0_i32 = arith.constant 0 : i32
    %c0_i32_0 = arith.constant 0 : i32
    return %arg0, %c0_i32 : i32, i32
  }
  func.func @transform_1(%arg0: i32) -> (i32, i32, i32) {
    %c0_i32 = arith.constant 0 : i32
    %c0_i32_0 = arith.constant 0 : i32
    %c0_i32_1 = arith.constant 0 : i32
    return %arg0, %c0_i32, %c0_i32_0 : i32, i32, i32
  }
  func.func @transform_2(%arg0: i32) -> (i32, i32) {
    %c0_i32 = arith.constant 0 : i32
    %c0_i32_0 = arith.constant 0 : i32
    return %arg0, %c0_i32 : i32, i32
  }
  func.func @transform_3(%arg0: i32) -> (i32, i32) {
    %c0_i32 = arith.constant 0 : i32
    %c0_i32_0 = arith.constant 0 : i32
    return %arg0, %c0_i32 : i32, i32
  }
  func.func @transform_4(%arg0: i32) -> (i32, i32) {
    %c0_i32 = arith.constant 0 : i32
    %c0_i32_0 = arith.constant 0 : i32
    %c0_i32_1 = arith.constant 0 : i32
    return %c0_i32, %c0_i32_0 : i32, i32
  }
  func.func @transform_5(%arg0: i32) -> (i32, i32) {
    %c0_i32 = arith.constant 0 : i32
    %c0_i32_0 = arith.constant 0 : i32
    %c0_i32_1 = arith.constant 0 : i32
    return %c0_i32, %c0_i32_0 : i32, i32
  }
  func.func @transform_6(%arg0: i32) -> (i32, i32) {
    %c0_i32 = arith.constant 0 : i32
    %c0_i32_0 = arith.constant 0 : i32
    %c0_i32_1 = arith.constant 0 : i32
    return %c0_i32, %c0_i32_0 : i32, i32
  }
  func.func @transform_7(%arg0: i32) -> (i32, i32) {
    %c0_i32 = arith.constant 0 : i32
    %c0_i32_0 = arith.constant 0 : i32
    %c0_i32_1 = arith.constant 0 : i32
    return %c0_i32, %c0_i32_0 : i32, i32
  }
  func.func @transform_8(%arg0: i32) -> (i32, i32) {
    %c0_i32 = arith.constant 0 : i32
    %c0_i32_0 = arith.constant 0 : i32
    %c0_i32_1 = arith.constant 0 : i32
    return %c0_i32, %c0_i32_0 : i32, i32
  }
  func.func @transform_9(%arg0: i32) -> (i32, i32) {
    %c0_i32 = arith.constant 0 : i32
    %c0_i32_0 = arith.constant 0 : i32
    return %arg0, %c0_i32 : i32, i32
  }
  func.func @transform_10(%arg0: i32) -> (i32, i32) {
    %c0_i32 = arith.constant 0 : i32
    %c0_i32_0 = arith.constant 0 : i32
    return %arg0, %c0_i32 : i32, i32
  }
  func.func @transform_11(%arg0: i32) -> (i32, i32) {
    %c0_i32 = arith.constant 0 : i32
    %c0_i32_0 = arith.constant 0 : i32
    return %arg0, %c0_i32 : i32, i32
  }
}

</mosaic_0001>

<llo_original>
// kernel: tpu_custom_call.1
$region0: #{tpu_custom_call.1}
  #allocation0 [shape = 'u32[]', space=smem, size = 0x4, offset = 0x4, fixed_abs, tag = 'smem constant byte address 0x4 - core index']
  #allocation1 [shape = 'u32[72,128]{1,0:T(1,128)}', space=vmem, size = 0x9000, scoped, tag = 'internal scratch']
  %s0 = inlined_call_operand.vmem [shape: bf16[2,64], index: 0, kind: input, shape index: {}]
  %s1 = inlined_call_operand.vmem [shape: f32[2,128,64], index: 1, kind: input, shape index: {}]
  %s2 = inlined_call_operand.vmem [shape: f32[2,128], index: 2, kind: input, shape index: {}]
  %s3 = inlined_call_operand.vmem [shape: s32[2,128], index: 3, kind: input, shape index: {}]
  %s4 = inlined_call_operand.vmem [shape: bf16[64,32], index: 4, kind: input, shape index: {}]
  %s5 = inlined_call_operand.vmem [shape: f32[1,32], index: 5, kind: input, shape index: {}]
  %s6 = inlined_call_operand.vmem [shape: bf16[64,32], index: 6, kind: input, shape index: {}]
  %s7 = inlined_call_operand.vmem [shape: bf16[1,32], index: 7, kind: input, shape index: {}]
  %s8 = inlined_call_operand.vmem [shape: bf16[1,32], index: 8, kind: input, shape index: {}]
  %s9 = inlined_call_operand.hbm [shape: f32[2,64], index: 9, kind: output, shape index: {0}]
  %s10 = inlined_call_operand.hbm [shape: f32[2,128], index: 10, kind: output, shape index: {1}]
  %s11 = inlined_call_operand.hbm [shape: f32[2,128], index: 11, kind: output, shape index: {2}]
  %12 = xla_tuple %s9, %s10, %s11
  %s13 = sld [smem:[#allocation0]]
  $region62: #{tpu_custom_call.1} parent=0
    _
  %s15 = ssub.s32 1, %s13
  %s16 = scalar_select 0, %s15, %s13
  $region1: #{tpu_custom_call.1} parent=0
    #allocation2 [shape = 'u8[1024]{0}', space=vmem, size = 0x400, scoped, tag = 'output window, operand 0, single buffered']
    #allocation3 [shape = 's32[1]{0}', space=sflag, size = 0x4, scoped, tag = 'scoped memory for tpu_custom_call.1']
    #allocation4 [shape = 'u8[1024]{0}', space=vmem, size = 0x400, scoped, tag = 'output window, operand 1, single buffered']
    #allocation5 [shape = 's32[1]{0}', space=sflag, size = 0x4, scoped, tag = 'scoped memory for tpu_custom_call.1']
    #allocation6 [shape = 'u8[1024]{0}', space=vmem, size = 0x400, scoped, tag = 'output window, operand 2, single buffered']
    %17 = vsyncpa [#allocation3], 0
    %18 = vsyncpa [#allocation5], 0
    // Predicated region
    $region2: #{tpu_custom_call.1} parent=1 // pred_check
      _
    $region3: #{tpu_custom_call.1} parent=1 // pred_check_branch
      %20 = sbr.rel (0) target = $region5
    $region4: #{tpu_custom_call.1} parent=1 // pred_region
      _
    $region5: #{tpu_custom_call.1} parent=1 // pred_fallthru
      _
    // Predicated region
    $region6: #{tpu_custom_call.1} parent=1 // pred_check
      _
    $region7: #{tpu_custom_call.1} parent=1 // pred_check_branch
      %22 = sbr.rel (0) target = $region9
    $region8: #{tpu_custom_call.1} parent=1 // pred_region
      _
    $region9: #{tpu_custom_call.1} parent=1 // pred_fallthru
      _
    // Predicated region
    $region10: #{tpu_custom_call.1} parent=1 // pred_check
      _
    $region11: #{tpu_custom_call.1} parent=1 // pred_check_branch
      %24 = sbr.rel (0) target = $region13
    $region12: #{tpu_custom_call.1} parent=1 // pred_region
      _
    $region13: #{tpu_custom_call.1} parent=1 // pred_fallthru
      _
    // Predicated region
    $region14: #{tpu_custom_call.1} parent=1 // pred_check
      _
    $region15: #{tpu_custom_call.1} parent=1 // pred_check_branch
      %26 = sbr.rel (0) target = $region17
    $region16: #{tpu_custom_call.1} parent=1 // pred_region
      _
    $region17: #{tpu_custom_call.1} parent=1 // pred_fallthru
      _
    // Predicated region
    $region18: #{tpu_custom_call.1} parent=1 // pred_check
      _
    $region19: #{tpu_custom_call.1} parent=1 // pred_check_branch
      %28 = sbr.rel (0) target = $region21
    $region20: #{tpu_custom_call.1} parent=1 // pred_region
      _
    $region21: #{tpu_custom_call.1} parent=1 // pred_fallthru
      _
    // Predicated region
    $region22: #{tpu_custom_call.1} parent=1 // pred_check
      _
    $region23: #{tpu_custom_call.1} parent=1 // pred_check_branch
      %30 = sbr.rel (0) target = $region25
    $region24: #{tpu_custom_call.1} parent=1 // pred_region
      _
    $region25: #{tpu_custom_call.1} parent=1 // pred_fallthru
      _
    // Predicated region
    $region26: #{tpu_custom_call.1} parent=1 // pred_check
      _
    $region27: #{tpu_custom_call.1} parent=1 // pred_check_branch
      %32 = sbr.rel (0) target = $region29
    $region28: #{tpu_custom_call.1} parent=1 // pred_region
      _
    $region29: #{tpu_custom_call.1} parent=1 // pred_fallthru
      _
    // Predicated region
    $region30: #{tpu_custom_call.1} parent=1 // pred_check
      _
    $region31: #{tpu_custom_call.1} parent=1 // pred_check_branch
      %34 = sbr.rel (0) target = $region33
    $region32: #{tpu_custom_call.1} parent=1 // pred_region
      _
    $region33: #{tpu_custom_call.1} parent=1 // pred_fallthru
      _
    // Predicated region
    $region34: #{tpu_custom_call.1} parent=1 // pred_check
      _
    $region35: #{tpu_custom_call.1} parent=1 // pred_check_branch
      %36 = sbr.rel (0) target = $region37
    $region36: #{tpu_custom_call.1} parent=1 // pred_region
      _
    $region37: #{tpu_custom_call.1} parent=1 // pred_fallthru
      _
    %v38 = vld [vmem:[%s0] sm:$0x1]
    %v39 = vld [vmem:[%s4] sm:$0xf]
    %v40 = vld [vmem:[%s4 + $0x4] sm:$0xf]
    %v41 = vld [vmem:[%s4 + $0x8] sm:$0xf]
    %v42 = vld [vmem:[%s4 + $0xc] sm:$0xf]
    %v43 = vld [vmem:[%s4 + $0x10] sm:$0xf]
    %v44 = vld [vmem:[%s4 + $0x14] sm:$0xf]
    %v45 = vld [vmem:[%s4 + $0x18] sm:$0xf]
    %v46 = vld [vmem:[%s4 + $0x1c] sm:$0xf]
    %v47 = vld [vmem:[%s5] sm:$0x1]
    %v49 = vperm.slane %v47, 0
    %v59 = vunpack.c.l.b16 %v39
    %v60 = vunpack.c.l.b16 %v40
    %v61 = vunpack.c.l.b16 %v41
    %v62 = vunpack.c.l.b16 %v42
    %v63 = vunpack.c.l.b16 %v43
    %v64 = vunpack.c.l.b16 %v44
    %v65 = vunpack.c.l.b16 %v45
    %v66 = vunpack.c.l.b16 %v46
    %v67 = vpack.c.b16 %v60, %v59
    %v68 = vpack.c.b16 %v62, %v61
    %v69 = vpack.c.b16 %v64, %v63
    %v70 = vpack.c.b16 %v66, %v65
    %vm75 = vcmask 523264
    %v77 = vsel %vm75, %v38, 0
    %79 = vmatpush.bf16.msra.mxu0 0
    %80 = vmatpush.bf16.msra.mxu0 0
    %81 = vmatpush.bf16.msra.mxu0 0
    %82 = vmatpush.bf16.msra.mxu0 0
    %83 = vmatpush.bf16.msra.mxu0 %v70
    %84 = vmatpush.bf16.msra.mxu0 %v69
    %85 = vmatpush.bf16.msra.mxu0 %v68
    %86 = vmatpush.bf16.msra.mxu0 %v67
    %87 = vmatmul.bf16.gmra.mxu0 %v77
    %v88 = vpop.f32.mrf.mxu0
    %v89 = vadd.f32 %v49, %v88
    %v90 = vpop.f32.mrf.mxu0
    %91 = vdwg.mxu0
    %v92 = vtanh.pop %v89
    %v93 = vmul.f32 %v92, 0.17677669
    %v94 = vld [vmem:[%s1] sm:$0xff]
    %v95 = vld [vmem:[%s1 + $0x8] sm:$0xff]
    %v96 = vld [vmem:[%s1 + $0x10] sm:$0xff]
    %v97 = vld [vmem:[%s1 + $0x18] sm:$0xff]
    %v98 = vld [vmem:[%s1 + $0x20] sm:$0xff]
    %v99 = vld [vmem:[%s1 + $0x28] sm:$0xff]
    %v100 = vld [vmem:[%s1 + $0x30] sm:$0xff]
    %v101 = vld [vmem:[%s1 + $0x38] sm:$0xff]
    %v102 = vld [vmem:[%s1 + $0x40] sm:$0xff]
    %v103 = vld [vmem:[%s1 + $0x48] sm:$0xff]
    %v104 = vld [vmem:[%s1 + $0x50] sm:$0xff]
    %v105 = vld [vmem:[%s1 + $0x58] sm:$0xff]
    %v106 = vld [vmem:[%s1 + $0x60] sm:$0xff]
    %v107 = vld [vmem:[%s1 + $0x68] sm:$0xff]
    %v108 = vld [vmem:[%s1 + $0x70] sm:$0xff]
    %v109 = vld [vmem:[%s1 + $0x78] sm:$0xff]
    %v110 = vld [vmem:[%s1 + $0x80] sm:$0xff]
    %v111 = vld [vmem:[%s1 + $0x88] sm:$0xff]
    %v112 = vld [vmem:[%s1 + $0x90] sm:$0xff]
    %v113 = vld [vmem:[%s1 + $0x98] sm:$0xff]
    %v114 = vld [vmem:[%s1 + $0xa0] sm:$0xff]
    %v115 = vld [vmem:[%s1 + $0xa8] sm:$0xff]
    %v116 = vld [vmem:[%s1 + $0xb0] sm:$0xff]
    %v117 = vld [vmem:[%s1 + $0xb8] sm:$0xff]
    %v118 = vld [vmem:[%s1 + $0xc0] sm:$0xff]
    %v119 = vld [vmem:[%s1 + $0xc8] sm:$0xff]
    %v120 = vld [vmem:[%s1 + $0xd0] sm:$0xff]
    %v121 = vld [vmem:[%s1 + $0xd8] sm:$0xff]
    %v122 = vld [vmem:[%s1 + $0xe0] sm:$0xff]
    %v123 = vld [vmem:[%s1 + $0xe8] sm:$0xff]
    %v124 = vld [vmem:[%s1 + $0xf0] sm:$0xff]
    %v125 = vld [vmem:[%s1 + $0xf8] sm:$0xff]
    %v126 = vpack.c.bf16 %v94, %v94
    %v127 = vpack.c.bf16 %v95, %v95
    %v128 = vpack.c.bf16 %v96, %v96
    %v129 = vpack.c.bf16 %v97, %v97
    %v130 = vpack.c.bf16 %v98, %v98
    %v131 = vpack.c.bf16 %v99, %v99
    %v132 = vpack.c.bf16 %v100, %v100
    %v133 = vpack.c.bf16 %v101, %v101
    %v134 = vpack.c.bf16 %v102, %v102
    %v135 = vpack.c.bf16 %v103, %v103
    %v136 = vpack.c.bf16 %v104, %v104
    %v137 = vpack.c.bf16 %v105, %v105
    %v138 = vpack.c.bf16 %v106, %v106
    %v139 = vpack.c.bf16 %v107, %v107
    %v140 = vpack.c.bf16 %v108, %v108
    %v141 = vpack.c.bf16 %v109, %v109
    %v142 = vpack.c.bf16 %v110, %v110
    %v143 = vpack.c.bf16 %v111, %v111
    %v144 = vpack.c.bf16 %v112, %v112
    %v145 = vpack.c.bf16 %v113, %v113
    %v146 = vpack.c.bf16 %v114, %v114
    %v147 = vpack.c.bf16 %v115, %v115
    %v148 = vpack.c.bf16 %v116, %v116
    %v149 = vpack.c.bf16 %v117, %v117
    %v150 = vpack.c.bf16 %v118, %v118
    %v151 = vpack.c.bf16 %v119, %v119
    %v152 = vpack.c.bf16 %v120, %v120
    %v153 = vpack.c.bf16 %v121, %v121
    %v154 = vpack.c.bf16 %v122, %v122
    %v155 = vpack.c.bf16 %v123, %v123
    %v156 = vpack.c.bf16 %v124, %v124
    %v157 = vpack.c.bf16 %v125, %v125
    %v158 = vld [vmem:[%s6] sm:$0xf]
    %v159 = vld [vmem:[%s6 + $0x4] sm:$0xf]
    %v160 = vld [vmem:[%s6 + $0x8] sm:$0xf]
    %v161 = vld [vmem:[%s6 + $0xc] sm:$0xf]
    %v162 = vld [vmem:[%s6 + $0x10] sm:$0xf]
    %v163 = vld [vmem:[%s6 + $0x14] sm:$0xf]
    %v164 = vld [vmem:[%s6 + $0x18] sm:$0xf]
    %v165 = vld [vmem:[%s6 + $0x1c] sm:$0xf]
    %v198 = vunpack.c.l.b16 %v126
    %v199 = vunpack.c.l.b16 %v127
    %v200 = vunpack.c.l.b16 %v128
    %v201 = vunpack.c.l.b16 %v129
    %v202 = vunpack.c.l.b16 %v130
    %v203 = vunpack.c.l.b16 %v131
    %v204 = vunpack.c.l.b16 %v132
    %v205 = vunpack.c.l.b16 %v133
    %v206 = vunpack.c.l.b16 %v134
    %v207 = vunpack.c.l.b16 %v135
    %v208 = vunpack.c.l.b16 %v136
    %v209 = vunpack.c.l.b16 %v137
    %v210 = vunpack.c.l.b16 %v138
    %v211 = vunpack.c.l.b16 %v139
    %v212 = vunpack.c.l.b16 %v140
    %v213 = vunpack.c.l.b16 %v141
    %v214 = vunpack.c.l.b16 %v142
    %v215 = vunpack.c.l.b16 %v143
    %v216 = vunpack.c.l.b16 %v144
    %v217 = vunpack.c.l.b16 %v145
    %v218 = vunpack.c.l.b16 %v146
    %v219 = vunpack.c.l.b16 %v147
    %v220 = vunpack.c.l.b16 %v148
    %v221 = vunpack.c.l.b16 %v149
    %v222 = vunpack.c.l.b16 %v150
    %v223 = vunpack.c.l.b16 %v151
    %v224 = vunpack.c.l.b16 %v152
    %v225 = vunpack.c.l.b16 %v153
    %v226 = vunpack.c.l.b16 %v154
    %v227 = vunpack.c.l.b16 %v155
    %v228 = vunpack.c.l.b16 %v156
    %v229 = vunpack.c.l.b16 %v157
    %v230 = vpack.c.b16 %v199, %v198
    %v231 = vpack.c.b16 %v201, %v200
    %v232 = vpack.c.b16 %v203, %v202
    %v233 = vpack.c.b16 %v205, %v204
    %v234 = vpack.c.b16 %v207, %v206
    %v235 = vpack.c.b16 %v209, %v208
    %v236 = vpack.c.b16 %v211, %v210
    %v237 = vpack.c.b16 %v213, %v212
    %v238 = vpack.c.b16 %v215, %v214
    %v239 = vpack.c.b16 %v217, %v216
    %v240 = vpack.c.b16 %v219, %v218
    %v241 = vpack.c.b16 %v221, %v220
    %v242 = vpack.c.b16 %v223, %v222
    %v243 = vpack.c.b16 %v225, %v224
    %v244 = vpack.c.b16 %v227, %v226
    %v245 = vpack.c.b16 %v229, %v228
    %v254 = vunpack.c.l.b16 %v158
    %v255 = vunpack.c.l.b16 %v159
    %v256 = vunpack.c.l.b16 %v160
    %v257 = vunpack.c.l.b16 %v161
    %v258 = vunpack.c.l.b16 %v162
    %v259 = vunpack.c.l.b16 %v163
    %v260 = vunpack.c.l.b16 %v164
    %v261 = vunpack.c.l.b16 %v165
    %v262 = vpack.c.b16 %v255, %v254
    %v263 = vpack.c.b16 %v257, %v256
    %v264 = vpack.c.b16 %v259, %v258
    %v265 = vpack.c.b16 %v261, %v260
    %v271 = vsel %vm75, %v230, 0
    %v274 = vsel %vm75, %v231, 0
    %v277 = vsel %vm75, %v232, 0
    %v280 = vsel %vm75, %v233, 0
    %v283 = vsel %vm75, %v234, 0
    %v286 = vsel %vm75, %v235, 0
    %v289 = vsel %vm75, %v236, 0
    %v292 = vsel %vm75, %v237, 0
    %v295 = vsel %vm75, %v238, 0
    %v298 = vsel %vm75, %v239, 0
    %v301 = vsel %vm75, %v240, 0
    %v304 = vsel %vm75, %v241, 0
    %v307 = vsel %vm75, %v242, 0
    %v310 = vsel %vm75, %v243, 0
    %v313 = vsel %vm75, %v244, 0
    %v316 = vsel %vm75, %v245, 0
    %318 = vmatpush.bf16.msra.mxu0 0
    %319 = vmatpush.bf16.msra.mxu0 0
    %320 = vmatpush.bf16.msra.mxu0 0
    %321 = vmatpush.bf16.msra.mxu0 0
    %322 = vmatpush.bf16.msra.mxu0 %v265
    %323 = vmatpush.bf16.msra.mxu0 %v264
    %324 = vmatpush.bf16.msra.mxu0 %v263
    %325 = vmatpush.bf16.msra.mxu0 %v262
    %326 = vmatmul.bf16.gmra.mxu0 %v271
    %v327 = vpop.f32.mrf.mxu0
    %v328 = vadd.f32 0.0, %v327
    %v329 = vpop.f32.mrf.mxu0
    %v330 = vadd.f32 0.0, %v329
    %331 = vmatmul.bf16.gmra.mxu0 %v274
    %v332 = vpop.f32.mrf.mxu0
    %v333 = vadd.f32 0.0, %v332
    %v334 = vpop.f32.mrf.mxu0
    %v335 = vadd.f32 0.0, %v334
    %336 = vmatmul.bf16.gmra.mxu0 %v277
    %v337 = vpop.f32.mrf.mxu0
    %v338 = vadd.f32 0.0, %v337
    %v339 = vpop.f32.mrf.mxu0
    %v340 = vadd.f32 0.0, %v339
    %341 = vmatmul.bf16.gmra.mxu0 %v280
    %v342 = vpop.f32.mrf.mxu0
    %v343 = vadd.f32 0.0, %v342
    %v344 = vpop.f32.mrf.mxu0
    %v345 = vadd.f32 0.0, %v344
    %346 = vmatmul.bf16.gmra.mxu0 %v283
    %v347 = vpop.f32.mrf.mxu0
    %v348 = vadd.f32 0.0, %v347
    %v349 = vpop.f32.mrf.mxu0
    %v350 = vadd.f32 0.0, %v349
    %351 = vmatmul.bf16.gmra.mxu0 %v286
    %v352 = vpop.f32.mrf.mxu0
    %v353 = vadd.f32 0.0, %v352
    %v354 = vpop.f32.mrf.mxu0
    %v355 = vadd.f32 0.0, %v354
    %356 = vmatmul.bf16.gmra.mxu0 %v289
    %v357 = vpop.f32.mrf.mxu0
    %v358 = vadd.f32 0.0, %v357
    %v359 = vpop.f32.mrf.mxu0
    %v360 = vadd.f32 0.0, %v359
    %361 = vmatmul.bf16.gmra.mxu0 %v292
    %v362 = vpop.f32.mrf.mxu0
    %v363 = vadd.f32 0.0, %v362
    %v364 = vpop.f32.mrf.mxu0
    %v365 = vadd.f32 0.0, %v364
    %366 = vmatmul.bf16.gmra.mxu0 %v295
    %v367 = vpop.f32.mrf.mxu0
    %v368 = vadd.f32 0.0, %v367
    %v369 = vpop.f32.mrf.mxu0
    %v370 = vadd.f32 0.0, %v369
    %371 = vmatmul.bf16.gmra.mxu0 %v298
    %v372 = vpop.f32.mrf.mxu0
    %v373 = vadd.f32 0.0, %v372
    %v374 = vpop.f32.mrf.mxu0
    %v375 = vadd.f32 0.0, %v374
    %376 = vmatmul.bf16.gmra.mxu0 %v301
    %v377 = vpop.f32.mrf.mxu0
    %v378 = vadd.f32 0.0, %v377
    %v379 = vpop.f32.mrf.mxu0
    %v380 = vadd.f32 0.0, %v379
    %381 = vmatmul.bf16.gmra.mxu0 %v304
    %v382 = vpop.f32.mrf.mxu0
    %v383 = vadd.f32 0.0, %v382
    %v384 = vpop.f32.mrf.mxu0
    %v385 = vadd.f32 0.0, %v384
    %386 = vmatmul.bf16.gmra.mxu0 %v307
    %v387 = vpop.f32.mrf.mxu0
    %v388 = vadd.f32 0.0, %v387
    %v389 = vpop.f32.mrf.mxu0
    %v390 = vadd.f32 0.0, %v389
    %391 = vmatmul.bf16.gmra.mxu0 %v310
    %v392 = vpop.f32.mrf.mxu0
    %v393 = vadd.f32 0.0, %v392
    %v394 = vpop.f32.mrf.mxu0
    %v395 = vadd.f32 0.0, %v394
    %396 = vmatmul.bf16.gmra.mxu0 %v313
    %v397 = vpop.f32.mrf.mxu0
    %v398 = vadd.f32 0.0, %v397
    %v399 = vpop.f32.mrf.mxu0
    %v400 = vadd.f32 0.0, %v399
    %401 = vmatmul.bf16.gmra.mxu0 %v316
    %v402 = vpop.f32.mrf.mxu0
    %v403 = vadd.f32 0.0, %v402
    %v404 = vpop.f32.mrf.mxu0
    %v405 = vadd.f32 0.0, %v404
    %406 = vdwg.mxu0
    %v407 = vld [vmem:[%s2] sm:$0x3]
    %v408 = vperm.slane %v407, 0
    %v409 = vlaneseq
    %v410 = vshrl.u32 %v409, 7
    %412 = vset.pattern.permute.xlu0 %v410
    %413 = vperm.xlu0 %412, %v408
    %v414 = vpop.permute.xlu0 %413
    %v415 = vlaneseq
    %v416 = vshrl.u32 %v415, 7
    %v417 = vadd.s32 %v416, 8
    %418 = vset.pattern.permute.xlu0 %v417
    %419 = vperm.xlu0 %418, %v408
    %v420 = vpop.permute.xlu0 %419
    %v421 = vlaneseq
    %v422 = vshrl.u32 %v421, 7
    %v423 = vadd.s32 %v422, 16
    %424 = vset.pattern.permute.xlu0 %v423
    %425 = vperm.xlu0 %424, %v408
    %v426 = vpop.permute.xlu0 %425
    %v427 = vlaneseq
    %v428 = vshrl.u32 %v427, 7
    %v429 = vadd.s32 %v428, 24
    %430 = vset.pattern.permute.xlu0 %v429
    %431 = vperm.xlu0 %430, %v408
    %v432 = vpop.permute.xlu0 %431
    %v433 = vlaneseq
    %v434 = vshrl.u32 %v433, 7
    %v435 = vadd.s32 %v434, 32
    %436 = vset.pattern.permute.xlu0 %v435
    %437 = vperm.xlu0 %436, %v408
    %v438 = vpop.permute.xlu0 %437
    %v439 = vlaneseq
    %v440 = vshrl.u32 %v439, 7
    %v441 = vadd.s32 %v440, 40
    %442 = vset.pattern.permute.xlu0 %v441
    %443 = vperm.xlu0 %442, %v408
    %v444 = vpop.permute.xlu0 %443
    %v445 = vlaneseq
    %v446 = vshrl.u32 %v445, 7
    %v447 = vadd.s32 %v446, 48
    %448 = vset.pattern.permute.xlu0 %v447
    %449 = vperm.xlu0 %448, %v408
    %v450 = vpop.permute.xlu0 %449
    %v451 = vlaneseq
    %v452 = vshrl.u32 %v451, 7
    %v453 = vadd.s32 %v452, 56
    %454 = vset.pattern.permute.xlu0 %v453
    %455 = vperm.xlu0 %454, %v408
    %v456 = vpop.permute.xlu0 %455
    %v457 = vlaneseq
    %v458 = vshrl.u32 %v457, 7
    %v459 = vadd.s32 %v458, 64
    %460 = vset.pattern.permute.xlu0 %v459
    %461 = vperm.xlu0 %460, %v408
    %v462 = vpop.permute.xlu0 %461
    %v463 = vlaneseq
    %v464 = vshrl.u32 %v463, 7
    %v465 = vadd.s32 %v464, 72
    %466 = vset.pattern.permute.xlu0 %v465
    %467 = vperm.xlu0 %466, %v408
    %v468 = vpop.permute.xlu0 %467
    %v469 = vlaneseq
    %v470 = vshrl.u32 %v469, 7
    %v471 = vadd.s32 %v470, 80
    %472 = vset.pattern.permute.xlu0 %v471
    %473 = vperm.xlu0 %472, %v408
    %v474 = vpop.permute.xlu0 %473
    %v475 = vlaneseq
    %v476 = vshrl.u32 %v475, 7
    %v477 = vadd.s32 %v476, 88
    %478 = vset.pattern.permute.xlu0 %v477
    %479 = vperm.xlu0 %478, %v408
    %v480 = vpop.permute.xlu0 %479
    %v481 = vlaneseq
    %v482 = vshrl.u32 %v481, 7
    %v483 = vadd.s32 %v482, 96
    %484 = vset.pattern.permute.xlu0 %v483
    %485 = vperm.xlu0 %484, %v408
    %v486 = vpop.permute.xlu0 %485
    %v487 = vlaneseq
    %v488 = vshrl.u32 %v487, 7
    %v489 = vadd.s32 %v488, 104
    %490 = vset.pattern.permute.xlu0 %v489
    %491 = vperm.xlu0 %490, %v408
    %v492 = vpop.permute.xlu0 %491
    %v493 = vlaneseq
    %v494 = vshrl.u32 %v493, 7
    %v495 = vadd.s32 %v494, 112
    %496 = vset.pattern.permute.xlu0 %v495
    %497 = vperm.xlu0 %496, %v408
    %v498 = vpop.permute.xlu0 %497
    %v499 = vlaneseq
    %v500 = vshrl.u32 %v499, 7
    %v501 = vadd.s32 %v500, 120
    %502 = vset.pattern.permute.xlu0 %v501
    %503 = vperm.xlu0 %502, %v408
    %v504 = vpop.permute.xlu0 %503
    %v505 = vperm.slane %v407, 1
    %v506 = vlaneseq
    %v507 = vshrl.u32 %v506, 7
    %509 = vset.pattern.permute.xlu0 %v507
    %510 = vperm.xlu0 %509, %v505
    %v511 = vpop.permute.xlu0 %510
    %v512 = vlaneseq
    %v513 = vshrl.u32 %v512, 7
    %v514 = vadd.s32 %v513, 8
    %515 = vset.pattern.permute.xlu0 %v514
    %516 = vperm.xlu0 %515, %v505
    %v517 = vpop.permute.xlu0 %516
    %v518 = vlaneseq
    %v519 = vshrl.u32 %v518, 7
    %v520 = vadd.s32 %v519, 16
    %521 = vset.pattern.permute.xlu0 %v520
    %522 = vperm.xlu0 %521, %v505
    %v523 = vpop.permute.xlu0 %522
    %v524 = vlaneseq
    %v525 = vshrl.u32 %v524, 7
    %v526 = vadd.s32 %v525, 24
    %527 = vset.pattern.permute.xlu0 %v526
    %528 = vperm.xlu0 %527, %v505
    %v529 = vpop.permute.xlu0 %528
    %v530 = vlaneseq
    %v531 = vshrl.u32 %v530, 7
    %v532 = vadd.s32 %v531, 32
    %533 = vset.pattern.permute.xlu0 %v532
    %534 = vperm.xlu0 %533, %v505
    %v535 = vpop.permute.xlu0 %534
    %v536 = vlaneseq
    %v537 = vshrl.u32 %v536, 7
    %v538 = vadd.s32 %v537, 40
    %539 = vset.pattern.permute.xlu0 %v538
    %540 = vperm.xlu0 %539, %v505
    %v541 = vpop.permute.xlu0 %540
    %v542 = vlaneseq
    %v543 = vshrl.u32 %v542, 7
    %v544 = vadd.s32 %v543, 48
    %545 = vset.pattern.permute.xlu0 %v544
    %546 = vperm.xlu0 %545, %v505
    %v547 = vpop.permute.xlu0 %546
    %v548 = vlaneseq
    %v549 = vshrl.u32 %v548, 7
    %v550 = vadd.s32 %v549, 56
    %551 = vset.pattern.permute.xlu0 %v550
    %552 = vperm.xlu0 %551, %v505
    %v553 = vpop.permute.xlu0 %552
    %v554 = vlaneseq
    %v555 = vshrl.u32 %v554, 7
    %v556 = vadd.s32 %v555, 64
    %557 = vset.pattern.permute.xlu0 %v556
    %558 = vperm.xlu0 %557, %v505
    %v559 = vpop.permute.xlu0 %558
    %v560 = vlaneseq
    %v561 = vshrl.u32 %v560, 7
    %v562 = vadd.s32 %v561, 72
    %563 = vset.pattern.permute.xlu0 %v562
    %564 = vperm.xlu0 %563, %v505
    %v565 = vpop.permute.xlu0 %564
    %v566 = vlaneseq
    %v567 = vshrl.u32 %v566, 7
    %v568 = vadd.s32 %v567, 80
    %569 = vset.pattern.permute.xlu0 %v568
    %570 = vperm.xlu0 %569, %v505
    %v571 = vpop.permute.xlu0 %570
    %v572 = vlaneseq
    %v573 = vshrl.u32 %v572, 7
    %v574 = vadd.s32 %v573, 88
    %575 = vset.pattern.permute.xlu0 %v574
    %576 = vperm.xlu0 %575, %v505
    %v577 = vpop.permute.xlu0 %576
    %v578 = vlaneseq
    %v579 = vshrl.u32 %v578, 7
    %v580 = vadd.s32 %v579, 96
    %581 = vset.pattern.permute.xlu0 %v580
    %582 = vperm.xlu0 %581, %v505
    %v583 = vpop.permute.xlu0 %582
    %v584 = vlaneseq
    %v585 = vshrl.u32 %v584, 7
    %v586 = vadd.s32 %v585, 104
    %587 = vset.pattern.permute.xlu0 %v586
    %588 = vperm.xlu0 %587, %v505
    %v589 = vpop.permute.xlu0 %588
    %v590 = vlaneseq
    %v591 = vshrl.u32 %v590, 7
    %v592 = vadd.s32 %v591, 112
    %593 = vset.pattern.permute.xlu0 %v592
    %594 = vperm.xlu0 %593, %v505
    %v595 = vpop.permute.xlu0 %594
    %v596 = vlaneseq
    %v597 = vshrl.u32 %v596, 7
    %v598 = vadd.s32 %v597, 120
    %599 = vset.pattern.permute.xlu0 %v598
    %600 = vperm.xlu0 %599, %v505
    %v601 = vpop.permute.xlu0 %600
    %v602 = vld [vmem:[%s7] sm:$0x1]
    %v603 = vunpack.c.l.bf16 %v602
    %v604 = vperm.slane %v603, 0
    %v605 = vmul.f32 %v414, %v604
    %v606 = vmul.f32 %v420, %v604
    %v607 = vmul.f32 %v426, %v604
    %v608 = vmul.f32 %v432, %v604
    %v609 = vmul.f32 %v438, %v604
    %v610 = vmul.f32 %v444, %v604
    %v611 = vmul.f32 %v450, %v604
    %v612 = vmul.f32 %v456, %v604
    %v613 = vmul.f32 %v462, %v604
    %v614 = vmul.f32 %v468, %v604
    %v615 = vmul.f32 %v474, %v604
    %v616 = vmul.f32 %v480, %v604
    %v617 = vmul.f32 %v486, %v604
    %v618 = vmul.f32 %v492, %v604
    %v619 = vmul.f32 %v498, %v604
    %v620 = vmul.f32 %v504, %v604
    %v621 = vmul.f32 %v511, %v604
    %v622 = vmul.f32 %v517, %v604
    %v623 = vmul.f32 %v523, %v604
    %v624 = vmul.f32 %v529, %v604
    %v625 = vmul.f32 %v535, %v604
    %v626 = vmul.f32 %v541, %v604
    %v627 = vmul.f32 %v547, %v604
    %v628 = vmul.f32 %v553, %v604
    %v629 = vmul.f32 %v559, %v604
    %v630 = vmul.f32 %v565, %v604
    %v631 = vmul.f32 %v571, %v604
    %v632 = vmul.f32 %v577, %v604
    %v633 = vmul.f32 %v583, %v604
    %v634 = vmul.f32 %v589, %v604
    %v635 = vmul.f32 %v595, %v604
    %v636 = vmul.f32 %v601, %v604
    %v637 = vadd.f32 %v328, %v605
    %v638 = vadd.f32 %v330, %v606
    %v639 = vadd.f32 %v333, %v607
    %v640 = vadd.f32 %v335, %v608
    %v641 = vadd.f32 %v338, %v609
    %v642 = vadd.f32 %v340, %v610
    %v643 = vadd.f32 %v343, %v611
    %v644 = vadd.f32 %v345, %v612
    %v645 = vadd.f32 %v348, %v613
    %v646 = vadd.f32 %v350, %v614
    %v647 = vadd.f32 %v353, %v615
    %v648 = vadd.f32 %v355, %v616
    %v649 = vadd.f32 %v358, %v617
    %v650 = vadd.f32 %v360, %v618
    %v651 = vadd.f32 %v363, %v619
    %v652 = vadd.f32 %v365, %v620
    %v653 = vadd.f32 %v368, %v621
    %v654 = vadd.f32 %v370, %v622
    %v655 = vadd.f32 %v373, %v623
    %v656 = vadd.f32 %v375, %v624
    %v657 = vadd.f32 %v378, %v625
    %v658 = vadd.f32 %v380, %v626
    %v659 = vadd.f32 %v383, %v627
    %v660 = vadd.f32 %v385, %v628
    %v661 = vadd.f32 %v388, %v629
    %v662 = vadd.f32 %v390, %v630
    %v663 = vadd.f32 %v393, %v631
    %v664 = vadd.f32 %v395, %v632
    %v665 = vadd.f32 %v398, %v633
    %v666 = vadd.f32 %v400, %v634
    %v667 = vadd.f32 %v403, %v635
    %v668 = vadd.f32 %v405, %v636
    %v669 = vld [vmem:[%s8] sm:$0x1]
    %v670 = vunpack.c.l.bf16 %v669
    %v671 = vperm.slane %v670, 0
    %v672 = vadd.f32 %v637, %v671
    %v673 = vadd.f32 %v638, %v671
    %v674 = vadd.f32 %v639, %v671
    %v675 = vadd.f32 %v640, %v671
    %v676 = vadd.f32 %v641, %v671
    %v677 = vadd.f32 %v642, %v671
    %v678 = vadd.f32 %v643, %v671
    %v679 = vadd.f32 %v644, %v671
    %v680 = vadd.f32 %v645, %v671
    %v681 = vadd.f32 %v646, %v671
    %v682 = vadd.f32 %v647, %v671
    %v683 = vadd.f32 %v648, %v671
    %v684 = vadd.f32 %v649, %v671
    %v685 = vadd.f32 %v650, %v671
    %v686 = vadd.f32 %v651, %v671
    %v687 = vadd.f32 %v652, %v671
    %v688 = vadd.f32 %v653, %v671
    %v689 = vadd.f32 %v654, %v671
    %v690 = vadd.f32 %v655, %v671
    %v691 = vadd.f32 %v656, %v671
    %v692 = vadd.f32 %v657, %v671
    %v693 = vadd.f32 %v658, %v671
    %v694 = vadd.f32 %v659, %v671
    %v695 = vadd.f32 %v660, %v671
    %v696 = vadd.f32 %v661, %v671
    %v697 = vadd.f32 %v662, %v671
    %v698 = vadd.f32 %v663, %v671
    %v699 = vadd.f32 %v664, %v671
    %v700 = vadd.f32 %v665, %v671
    %v701 = vadd.f32 %v666, %v671
    %v702 = vadd.f32 %v667, %v671
    %v703 = vadd.f32 %v668, %v671
    %v704 = vtanh.pop %v672
    %v705 = vtanh.pop %v673
    %v706 = vtanh.pop %v674
    %v707 = vtanh.pop %v675
    %v708 = vtanh.pop %v676
    %v709 = vtanh.pop %v677
    %v710 = vtanh.pop %v678
    %v711 = vtanh.pop %v679
    %v712 = vtanh.pop %v680
    %v713 = vtanh.pop %v681
    %v714 = vtanh.pop %v682
    %v715 = vtanh.pop %v683
    %v716 = vtanh.pop %v684
    %v717 = vtanh.pop %v685
    %v718 = vtanh.pop %v686
    %v719 = vtanh.pop %v687
    %v720 = vtanh.pop %v688
    %v721 = vtanh.pop %v689
    %v722 = vtanh.pop %v690
    %v723 = vtanh.pop %v691
    %v724 = vtanh.pop %v692
    %v725 = vtanh.pop %v693
    %v726 = vtanh.pop %v694
    %v727 = vtanh.pop %v695
    %v728 = vtanh.pop %v696
    %v729 = vtanh.pop %v697
    %v730 = vtanh.pop %v698
    %v731 = vtanh.pop %v699
    %v732 = vtanh.pop %v700
    %v733 = vtanh.pop %v701
    %v734 = vtanh.pop %v702
    %v735 = vtanh.pop %v703
    %v737 = vrot.slane %v93, 1
    %v738 = vperm.slane %v93, 0
    %v739 = vperm.slane %v737, 0
    %v742 = vmul.f32 %v738, %v704
    %v743 = vmul.f32 %v738, %v705
    %v744 = vmul.f32 %v738, %v706
    %v745 = vmul.f32 %v738, %v707
    %v746 = vmul.f32 %v738, %v708
    %v747 = vmul.f32 %v738, %v709
    %v748 = vmul.f32 %v738, %v710
    %v749 = vmul.f32 %v738, %v711
    %v750 = vmul.f32 %v738, %v712
    %v751 = vmul.f32 %v738, %v713
    %v752 = vmul.f32 %v738, %v714
    %v753 = vmul.f32 %v738, %v715
    %v754 = vmul.f32 %v738, %v716
    %v755 = vmul.f32 %v738, %v717
    %v756 = vmul.f32 %v738, %v718
    %v757 = vmul.f32 %v738, %v719
    %v758 = vmul.f32 %v739, %v720
    %v759 = vmul.f32 %v739, %v721
    %v760 = vmul.f32 %v739, %v722
    %v761 = vmul.f32 %v739, %v723
    %v762 = vmul.f32 %v739, %v724
    %v763 = vmul.f32 %v739, %v725
    %v764 = vmul.f32 %v739, %v726
    %v765 = vmul.f32 %v739, %v727
    %v766 = vmul.f32 %v739, %v728
    %v767 = vmul.f32 %v739, %v729
    %v768 = vmul.f32 %v739, %v730
    %v769 = vmul.f32 %v739, %v731
    %v770 = vmul.f32 %v739, %v732
    %v771 = vmul.f32 %v739, %v733
    %v772 = vmul.f32 %v739, %v734
    %v773 = vmul.f32 %v739, %v735
    %vm774 = vcmask 261120
    %v775 = vsel %vm774, %v742, 0.0
    %776 = vadd.xlane.f32.xlu0 %v775
    %v777 = vpop.xlane.xlu0 %776
    %v778 = vsel %vm774, %v743, 0.0
    %779 = vadd.xlane.f32.xlu0 %v778
    %v780 = vpop.xlane.xlu0 %779
    %v781 = vsel %vm774, %v744, 0.0
    %782 = vadd.xlane.f32.xlu0 %v781
    %v783 = vpop.xlane.xlu0 %782
    %v784 = vsel %vm774, %v745, 0.0
    %785 = vadd.xlane.f32.xlu0 %v784
    %v786 = vpop.xlane.xlu0 %785
    %v787 = vsel %vm774, %v746, 0.0
    %788 = vadd.xlane.f32.xlu0 %v787
    %v789 = vpop.xlane.xlu0 %788
    %v790 = vsel %vm774, %v747, 0.0
    %791 = vadd.xlane.f32.xlu0 %v790
    %v792 = vpop.xlane.xlu0 %791
    %v793 = vsel %vm774, %v748, 0.0
    %794 = vadd.xlane.f32.xlu0 %v793
    %v795 = vpop.xlane.xlu0 %794
    %v796 = vsel %vm774, %v749, 0.0
    %797 = vadd.xlane.f32.xlu0 %v796
    %v798 = vpop.xlane.xlu0 %797
    %v799 = vsel %vm774, %v750, 0.0
    %800 = vadd.xlane.f32.xlu0 %v799
    %v801 = vpop.xlane.xlu0 %800
    %v802 = vsel %vm774, %v751, 0.0
    %803 = vadd.xlane.f32.xlu0 %v802
    %v804 = vpop.xlane.xlu0 %803
    %v805 = vsel %vm774, %v752, 0.0
    %806 = vadd.xlane.f32.xlu0 %v805
    %v807 = vpop.xlane.xlu0 %806
    %v808 = vsel %vm774, %v753, 0.0
    %809 = vadd.xlane.f32.xlu0 %v808
    %v810 = vpop.xlane.xlu0 %809
    %v811 = vsel %vm774, %v754, 0.0
    %812 = vadd.xlane.f32.xlu0 %v811
    %v813 = vpop.xlane.xlu0 %812
    %v814 = vsel %vm774, %v755, 0.0
    %815 = vadd.xlane.f32.xlu0 %v814
    %v816 = vpop.xlane.xlu0 %815
    %v817 = vsel %vm774, %v756, 0.0
    %818 = vadd.xlane.f32.xlu0 %v817
    %v819 = vpop.xlane.xlu0 %818
    %v820 = vsel %vm774, %v757, 0.0
    %821 = vadd.xlane.f32.xlu0 %v820
    %v822 = vpop.xlane.xlu0 %821
    %v823 = vsel %vm774, %v758, 0.0
    %824 = vadd.xlane.f32.xlu0 %v823
    %v825 = vpop.xlane.xlu0 %824
    %v826 = vsel %vm774, %v759, 0.0
    %827 = vadd.xlane.f32.xlu0 %v826
    %v828 = vpop.xlane.xlu0 %827
    %v829 = vsel %vm774, %v760, 0.0
    %830 = vadd.xlane.f32.xlu0 %v829
    %v831 = vpop.xlane.xlu0 %830
    %v832 = vsel %vm774, %v761, 0.0
    %833 = vadd.xlane.f32.xlu0 %v832
    %v834 = vpop.xlane.xlu0 %833
    %v835 = vsel %vm774, %v762, 0.0
    %836 = vadd.xlane.f32.xlu0 %v835
    %v837 = vpop.xlane.xlu0 %836
    %v838 = vsel %vm774, %v763, 0.0
    %839 = vadd.xlane.f32.xlu0 %v838
    %v840 = vpop.xlane.xlu0 %839
    %v841 = vsel %vm774, %v764, 0.0
    %842 = vadd.xlane.f32.xlu0 %v841
    %v843 = vpop.xlane.xlu0 %842
    %v844 = vsel %vm774, %v765, 0.0
    %845 = vadd.xlane.f32.xlu0 %v844
    %v846 = vpop.xlane.xlu0 %845
    %v847 = vsel %vm774, %v766, 0.0
    %848 = vadd.xlane.f32.xlu0 %v847
    %v849 = vpop.xlane.xlu0 %848
    %v850 = vsel %vm774, %v767, 0.0
    %851 = vadd.xlane.f32.xlu0 %v850
    %v852 = vpop.xlane.xlu0 %851
    %v853 = vsel %vm774, %v768, 0.0
    %854 = vadd.xlane.f32.xlu0 %v853
    %v855 = vpop.xlane.xlu0 %854
    %v856 = vsel %vm774, %v769, 0.0
    %857 = vadd.xlane.f32.xlu0 %v856
    %v858 = vpop.xlane.xlu0 %857
    %v859 = vsel %vm774, %v770, 0.0
    %860 = vadd.xlane.f32.xlu0 %v859
    %v861 = vpop.xlane.xlu0 %860
    %v862 = vsel %vm774, %v771, 0.0
    %863 = vadd.xlane.f32.xlu0 %v862
    %v864 = vpop.xlane.xlu0 %863
    %v865 = vsel %vm774, %v772, 0.0
    %866 = vadd.xlane.f32.xlu0 %v865
    %v867 = vpop.xlane.xlu0 %866
    %v868 = vsel %vm774, %v773, 0.0
    %869 = vadd.xlane.f32.xlu0 %v868
    %v870 = vpop.xlane.xlu0 %869
    %v871 = vld [vmem:[%s3] sm:$0x3]
    %vm872 = vcmp.eq.s32.totalorder %v871, 0
    %v905 = vlaneseq
    %v906 = vand.u32 %v905, 127
    %v907 = vperm.slane %v777, %v906
    %v908 = vadd.s32 %v906, 4294967288
    %v909 = vperm.slane %v780, %v908
    %vm910 = vcmask 130112
    %v911 = vsel %vm910, %v909, %v907
    %v912 = vadd.s32 %v906, 4294967280
    %v913 = vperm.slane %v783, %v912
    %vm914 = vcmask 195712
    %v915 = vsel %vm914, %v913, %v911
    %v916 = vadd.s32 %v906, 4294967272
    %v917 = vperm.slane %v786, %v916
    %vm918 = vcmask 261312
    %v919 = vsel %vm918, %v917, %v915
    %v920 = vadd.s32 %v906, 4294967264
    %v921 = vperm.slane %v789, %v920
    %vm922 = vcmask 326912
    %v923 = vsel %vm922, %v921, %v919
    %v924 = vadd.s32 %v906, 4294967256
    %v925 = vperm.slane %v792, %v924
    %vm926 = vcmask 392512
    %v927 = vsel %vm926, %v925, %v923
    %v928 = vadd.s32 %v906, 4294967248
    %v929 = vperm.slane %v795, %v928
    %vm930 = vcmask 458112
    %v931 = vsel %vm930, %v929, %v927
    %v932 = vadd.s32 %v906, 4294967240
    %v933 = vperm.slane %v798, %v932
    %vm934 = vcmask 523712
    %v935 = vsel %vm934, %v933, %v931
    %v936 = vadd.s32 %v906, 4294967232
    %v937 = vperm.slane %v801, %v936
    %vm938 = vcmask 589312
    %v939 = vsel %vm938, %v937, %v935
    %v940 = vadd.s32 %v906, 4294967224
    %v941 = vperm.slane %v804, %v940
    %vm942 = vcmask 654912
    %v943 = vsel %vm942, %v941, %v939
    %v944 = vadd.s32 %v906, 4294967216
    %v945 = vperm.slane %v807, %v944
    %vm946 = vcmask 720512
    %v947 = vsel %vm946, %v945, %v943
    %v948 = vadd.s32 %v906, 4294967208
    %v949 = vperm.slane %v810, %v948
    %vm950 = vcmask 786112
    %v951 = vsel %vm950, %v949, %v947
    %v952 = vadd.s32 %v906, 4294967200
    %v953 = vperm.slane %v813, %v952
    %vm954 = vcmask 851712
    %v955 = vsel %vm954, %v953, %v951
    %v956 = vadd.s32 %v906, 4294967192
    %v957 = vperm.slane %v816, %v956
    %vm958 = vcmask 917312
    %v959 = vsel %vm958, %v957, %v955
    %v960 = vadd.s32 %v906, 4294967184
    %v961 = vperm.slane %v819, %v960
    %vm962 = vcmask 982912
    %v963 = vsel %vm962, %v961, %v959
    %v964 = vadd.s32 %v906, 4294967176
    %v965 = vperm.slane %v822, %v964
    %vm966 = vcmask 1048512
    %v967 = vsel %vm966, %v965, %v963
    %v968 = vperm.slane %v825, %v906
    %v969 = vperm.slane %v828, %v908
    %v970 = vsel %vm910, %v969, %v968
    %v971 = vperm.slane %v831, %v912
    %v972 = vsel %vm914, %v971, %v970
    %v973 = vperm.slane %v834, %v916
    %v974 = vsel %vm918, %v973, %v972
    %v975 = vperm.slane %v837, %v920
    %v976 = vsel %vm922, %v975, %v974
    %v977 = vperm.slane %v840, %v924
    %v978 = vsel %vm926, %v977, %v976
    %v979 = vperm.slane %v843, %v928
    %v980 = vsel %vm930, %v979, %v978
    %v981 = vperm.slane %v846, %v932
    %v982 = vsel %vm934, %v981, %v980
    %v983 = vperm.slane %v849, %v936
    %v984 = vsel %vm938, %v983, %v982
    %v985 = vperm.slane %v852, %v940
    %v986 = vsel %vm942, %v985, %v984
    %v987 = vperm.slane %v855, %v944
    %v988 = vsel %vm946, %v987, %v986
    %v989 = vperm.slane %v858, %v948
    %v990 = vsel %vm950, %v989, %v988
    %v991 = vperm.slane %v861, %v952
    %v992 = vsel %vm954, %v991, %v990
    %v993 = vperm.slane %v864, %v956
    %v994 = vsel %vm958, %v993, %v992
    %v995 = vperm.slane %v867, %v960
    %v996 = vsel %vm962, %v995, %v994
    %v997 = vperm.slane %v870, %v964
    %v998 = vsel %vm966, %v997, %v996
    %vm999 = vcmask 1041409
    %v1000 = vsel %vm999, %v998, %v967
    %v1002 = vsel %vm872, -1e+18, %v1000
    %1003 = vst [vmem:[#allocation6] sm:$0x3] %v1002
    %vm1004 = vcmask 1041408
    %v1005 = vsel %vm1004, %v1002, -inf
    %1006 = vmax.xlane.f32.xlu0 %v1005
    %v1007 = vpop.xlane.xlu0 %1006
    %v1008 = vsub.f32 %v1002, %v1007
    %v1009 = vmul.f32 %v1008, 1.442695
    %v1010 = vpow.pop %v1009
    %v1011 = vsel %vm1004, %v1010, 0.0
    %1012 = vadd.xlane.f32.xlu0 %v1011
    %v1013 = vpop.xlane.xlu0 %1012
    %v1014 = vrcp.pop %v1013
    %v1015 = vmul.f32 %v1010, %v1014
    %1016 = vst [vmem:[#allocation4] sm:$0x3] %v1015
    %v1017 = vperm.slane %v1015, 0
    %v1018 = vlaneseq
    %v1019 = vshrl.u32 %v1018, 7
    %1021 = vset.pattern.permute.xlu0 %v1019
    %1022 = vperm.xlu0 %1021, %v1017
    %v1023 = vpop.permute.xlu0 %1022
    %v1024 = vlaneseq
    %v1025 = vshrl.u32 %v1024, 7
    %v1026 = vadd.s32 %v1025, 8
    %1027 = vset.pattern.permute.xlu0 %v1026
    %1028 = vperm.xlu0 %1027, %v1017
    %v1029 = vpop.permute.xlu0 %1028
    %v1030 = vlaneseq
    %v1031 = vshrl.u32 %v1030, 7
    %v1032 = vadd.s32 %v1031, 16
    %1033 = vset.pattern.permute.xlu0 %v1032
    %1034 = vperm.xlu0 %1033, %v1017
    %v1035 = vpop.permute.xlu0 %1034
    %v1036 = vlaneseq
    %v1037 = vshrl.u32 %v1036, 7
    %v1038 = vadd.s32 %v1037, 24
    %1039 = vset.pattern.permute.xlu0 %v1038
    %1040 = vperm.xlu0 %1039, %v1017
    %v1041 = vpop.permute.xlu0 %1040
    %v1042 = vlaneseq
    %v1043 = vshrl.u32 %v1042, 7
    %v1044 = vadd.s32 %v1043, 32
    %1045 = vset.pattern.permute.xlu0 %v1044
    %1046 = vperm.xlu0 %1045, %v1017
    %v1047 = vpop.permute.xlu0 %1046
    %v1048 = vlaneseq
    %v1049 = vshrl.u32 %v1048, 7
    %v1050 = vadd.s32 %v1049, 40
    %1051 = vset.pattern.permute.xlu0 %v1050
    %1052 = vperm.xlu0 %1051, %v1017
    %v1053 = vpop.permute.xlu0 %1052
    %v1054 = vlaneseq
    %v1055 = vshrl.u32 %v1054, 7
    %v1056 = vadd.s32 %v1055, 48
    %1057 = vset.pattern.permute.xlu0 %v1056
    %1058 = vperm.xlu0 %1057, %v1017
    %v1059 = vpop.permute.xlu0 %1058
    %v1060 = vlaneseq
    %v1061 = vshrl.u32 %v1060, 7
    %v1062 = vadd.s32 %v1061, 56
    %1063 = vset.pattern.permute.xlu0 %v1062
    %1064 = vperm.xlu0 %1063, %v1017
    %v1065 = vpop.permute.xlu0 %1064
    %v1066 = vlaneseq
    %v1067 = vshrl.u32 %v1066, 7
    %v1068 = vadd.s32 %v1067, 64
    %1069 = vset.pattern.permute.xlu0 %v1068
    %1070 = vperm.xlu0 %1069, %v1017
    %v1071 = vpop.permute.xlu0 %1070
    %v1072 = vlaneseq
    %v1073 = vshrl.u32 %v1072, 7
    %v1074 = vadd.s32 %v1073, 72
    %1075 = vset.pattern.permute.xlu0 %v1074
    %1076 = vperm.xlu0 %1075, %v1017
    %v1077 = vpop.permute.xlu0 %1076
    %v1078 = vlaneseq
    %v1079 = vshrl.u32 %v1078, 7
    %v1080 = vadd.s32 %v1079, 80
    %1081 = vset.pattern.permute.xlu0 %v1080
    %1082 = vperm.xlu0 %1081, %v1017
    %v1083 = vpop.permute.xlu0 %1082
    %v1084 = vlaneseq
    %v1085 = vshrl.u32 %v1084, 7
    %v1086 = vadd.s32 %v1085, 88
    %1087 = vset.pattern.permute.xlu0 %v1086
    %1088 = vperm.xlu0 %1087, %v1017
    %v1089 = vpop.permute.xlu0 %1088
    %v1090 = vlaneseq
    %v1091 = vshrl.u32 %v1090, 7
    %v1092 = vadd.s32 %v1091, 96
    %1093 = vset.pattern.permute.xlu0 %v1092
    %1094 = vperm.xlu0 %1093, %v1017
    %v1095 = vpop.permute.xlu0 %1094
    %v1096 = vlaneseq
    %v1097 = vshrl.u32 %v1096, 7
    %v1098 = vadd.s32 %v1097, 104
    %1099 = vset.pattern.permute.xlu0 %v1098
    %1100 = vperm.xlu0 %1099, %v1017
    %v1101 = vpop.permute.xlu0 %1100
    %v1102 = vlaneseq
    %v1103 = vshrl.u32 %v1102, 7
    %v1104 = vadd.s32 %v1103, 112
    %1105 = vset.pattern.permute.xlu0 %v1104
    %1106 = vperm.xlu0 %1105, %v1017
    %v1107 = vpop.permute.xlu0 %1106
    %v1108 = vlaneseq
    %v1109 = vshrl.u32 %v1108, 7
    %v1110 = vadd.s32 %v1109, 120
    %1111 = vset.pattern.permute.xlu0 %v1110
    %1112 = vperm.xlu0 %1111, %v1017
    %v1113 = vpop.permute.xlu0 %1112
    %v1114 = vperm.slane %v1015, 1
    %v1115 = vlaneseq
    %v1116 = vshrl.u32 %v1115, 7
    %1118 = vset.pattern.permute.xlu0 %v1116
    %1119 = vperm.xlu0 %1118, %v1114
    %v1120 = vpop.permute.xlu0 %1119
    %v1121 = vlaneseq
    %v1122 = vshrl.u32 %v1121, 7
    %v1123 = vadd.s32 %v1122, 8
    %1124 = vset.pattern.permute.xlu0 %v1123
    %1125 = vperm.xlu0 %1124, %v1114
    %v1126 = vpop.permute.xlu0 %1125
    %v1127 = vlaneseq
    %v1128 = vshrl.u32 %v1127, 7
    %v1129 = vadd.s32 %v1128, 16
    %1130 = vset.pattern.permute.xlu0 %v1129
    %1131 = vperm.xlu0 %1130, %v1114
    %v1132 = vpop.permute.xlu0 %1131
    %v1133 = vlaneseq
    %v1134 = vshrl.u32 %v1133, 7
    %v1135 = vadd.s32 %v1134, 24
    %1136 = vset.pattern.permute.xlu0 %v1135
    %1137 = vperm.xlu0 %1136, %v1114
    %v1138 = vpop.permute.xlu0 %1137
    %v1139 = vlaneseq
    %v1140 = vshrl.u32 %v1139, 7
    %v1141 = vadd.s32 %v1140, 32
    %1142 = vset.pattern.permute.xlu0 %v1141
    %1143 = vperm.xlu0 %1142, %v1114
    %v1144 = vpop.permute.xlu0 %1143
    %v1145 = vlaneseq
    %v1146 = vshrl.u32 %v1145, 7
    %v1147 = vadd.s32 %v1146, 40
    %1148 = vset.pattern.permute.xlu0 %v1147
    %1149 = vperm.xlu0 %1148, %v1114
    %v1150 = vpop.permute.xlu0 %1149
    %v1151 = vlaneseq
    %v1152 = vshrl.u32 %v1151, 7
    %v1153 = vadd.s32 %v1152, 48
    %1154 = vset.pattern.permute.xlu0 %v1153
    %1155 = vperm.xlu0 %1154, %v1114
    %v1156 = vpop.permute.xlu0 %1155
    %v1157 = vlaneseq
    %v1158 = vshrl.u32 %v1157, 7
    %v1159 = vadd.s32 %v1158, 56
    %1160 = vset.pattern.permute.xlu0 %v1159
    %1161 = vperm.xlu0 %1160, %v1114
    %v1162 = vpop.permute.xlu0 %1161
    %v1163 = vlaneseq
    %v1164 = vshrl.u32 %v1163, 7
    %v1165 = vadd.s32 %v1164, 64
    %1166 = vset.pattern.permute.xlu0 %v1165
    %1167 = vperm.xlu0 %1166, %v1114
    %v1168 = vpop.permute.xlu0 %1167
    %v1169 = vlaneseq
    %v1170 = vshrl.u32 %v1169, 7
    %v1171 = vadd.s32 %v1170, 72
    %1172 = vset.pattern.permute.xlu0 %v1171
    %1173 = vperm.xlu0 %1172, %v1114
    %v1174 = vpop.permute.xlu0 %1173
    %v1175 = vlaneseq
    %v1176 = vshrl.u32 %v1175, 7
    %v1177 = vadd.s32 %v1176, 80
    %1178 = vset.pattern.permute.xlu0 %v1177
    %1179 = vperm.xlu0 %1178, %v1114
    %v1180 = vpop.permute.xlu0 %1179
    %v1181 = vlaneseq
    %v1182 = vshrl.u32 %v1181, 7
    %v1183 = vadd.s32 %v1182, 88
    %1184 = vset.pattern.permute.xlu0 %v1183
    %1185 = vperm.xlu0 %1184, %v1114
    %v1186 = vpop.permute.xlu0 %1185
    %v1187 = vlaneseq
    %v1188 = vshrl.u32 %v1187, 7
    %v1189 = vadd.s32 %v1188, 96
    %1190 = vset.pattern.permute.xlu0 %v1189
    %1191 = vperm.xlu0 %1190, %v1114
    %v1192 = vpop.permute.xlu0 %1191
    %v1193 = vlaneseq
    %v1194 = vshrl.u32 %v1193, 7
    %v1195 = vadd.s32 %v1194, 104
    %1196 = vset.pattern.permute.xlu0 %v1195
    %1197 = vperm.xlu0 %1196, %v1114
    %v1198 = vpop.permute.xlu0 %1197
    %v1199 = vlaneseq
    %v1200 = vshrl.u32 %v1199, 7
    %v1201 = vadd.s32 %v1200, 112
    %1202 = vset.pattern.permute.xlu0 %v1201
    %1203 = vperm.xlu0 %1202, %v1114
    %v1204 = vpop.permute.xlu0 %1203
    %v1205 = vlaneseq
    %v1206 = vshrl.u32 %v1205, 7
    %v1207 = vadd.s32 %v1206, 120
    %1208 = vset.pattern.permute.xlu0 %v1207
    %1209 = vperm.xlu0 %1208, %v1114
    %v1210 = vpop.permute.xlu0 %1209
    %v1211 = vld [vmem:[%s1] sm:$0xff]
    %v1212 = vld [vmem:[%s1 + $0x8] sm:$0xff]
    %v1213 = vld [vmem:[%s1 + $0x10] sm:$0xff]
    %v1214 = vld [vmem:[%s1 + $0x18] sm:$0xff]
    %v1215 = vld [vmem:[%s1 + $0x20] sm:$0xff]
    %v1216 = vld [vmem:[%s1 + $0x28] sm:$0xff]
    %v1217 = vld [vmem:[%s1 + $0x30] sm:$0xff]
    %v1218 = vld [vmem:[%s1 + $0x38] sm:$0xff]
    %v1219 = vld [vmem:[%s1 + $0x40] sm:$0xff]
    %v1220 = vld [vmem:[%s1 + $0x48] sm:$0xff]
    %v1221 = vld [vmem:[%s1 + $0x50] sm:$0xff]
    %v1222 = vld [vmem:[%s1 + $0x58] sm:$0xff]
    %v1223 = vld [vmem:[%s1 + $0x60] sm:$0xff]
    %v1224 = vld [vmem:[%s1 + $0x68] sm:$0xff]
    %v1225 = vld [vmem:[%s1 + $0x70] sm:$0xff]
    %v1226 = vld [vmem:[%s1 + $0x78] sm:$0xff]
    %v1227 = vld [vmem:[%s1 + $0x80] sm:$0xff]
    %v1228 = vld [vmem:[%s1 + $0x88] sm:$0xff]
    %v1229 = vld [vmem:[%s1 + $0x90] sm:$0xff]
    %v1230 = vld [vmem:[%s1 + $0x98] sm:$0xff]
    %v1231 = vld [vmem:[%s1 + $0xa0] sm:$0xff]
    %v1232 = vld [vmem:[%s1 + $0xa8] sm:$0xff]
    %v1233 = vld [vmem:[%s1 + $0xb0] sm:$0xff]
    %v1234 = vld [vmem:[%s1 + $0xb8] sm:$0xff]
    %v1235 = vld [vmem:[%s1 + $0xc0] sm:$0xff]
    %v1236 = vld [vmem:[%s1 + $0xc8] sm:$0xff]
    %v1237 = vld [vmem:[%s1 + $0xd0] sm:$0xff]
    %v1238 = vld [vmem:[%s1 + $0xd8] sm:$0xff]
    %v1239 = vld [vmem:[%s1 + $0xe0] sm:$0xff]
    %v1240 = vld [vmem:[%s1 + $0xe8] sm:$0xff]
    %v1241 = vld [vmem:[%s1 + $0xf0] sm:$0xff]
    %v1242 = vld [vmem:[%s1 + $0xf8] sm:$0xff]
    %v1243 = vmul.f32 %v1023, %v1211
    %v1244 = vmul.f32 %v1029, %v1212
    %v1245 = vmul.f32 %v1035, %v1213
    %v1246 = vmul.f32 %v1041, %v1214
    %v1247 = vmul.f32 %v1047, %v1215
    %v1248 = vmul.f32 %v1053, %v1216
    %v1249 = vmul.f32 %v1059, %v1217
    %v1250 = vmul.f32 %v1065, %v1218
    %v1251 = vmul.f32 %v1071, %v1219
    %v1252 = vmul.f32 %v1077, %v1220
    %v1253 = vmul.f32 %v1083, %v1221
    %v1254 = vmul.f32 %v1089, %v1222
    %v1255 = vmul.f32 %v1095, %v1223
    %v1256 = vmul.f32 %v1101, %v1224
    %v1257 = vmul.f32 %v1107, %v1225
    %v1258 = vmul.f32 %v1113, %v1226
    %v1259 = vmul.f32 %v1120, %v1227
    %v1260 = vmul.f32 %v1126, %v1228
    %v1261 = vmul.f32 %v1132, %v1229
    %v1262 = vmul.f32 %v1138, %v1230
    %v1263 = vmul.f32 %v1144, %v1231
    %v1264 = vmul.f32 %v1150, %v1232
    %v1265 = vmul.f32 %v1156, %v1233
    %v1266 = vmul.f32 %v1162, %v1234
    %v1267 = vmul.f32 %v1168, %v1235
    %v1268 = vmul.f32 %v1174, %v1236
    %v1269 = vmul.f32 %v1180, %v1237
    %v1270 = vmul.f32 %v1186, %v1238
    %v1271 = vmul.f32 %v1192, %v1239
    %v1272 = vmul.f32 %v1198, %v1240
    %v1273 = vmul.f32 %v1204, %v1241
    %v1274 = vmul.f32 %v1210, %v1242
    %v1275 = vsel %vm75, %v1243, 0.0
    %v1276 = vsel %vm75, %v1244, 0.0
    %v1277 = vadd.f32 %v1275, %v1276
    %v1278 = vsel %vm75, %v1245, 0.0
    %v1279 = vadd.f32 %v1277, %v1278
    %v1280 = vsel %vm75, %v1246, 0.0
    %v1281 = vadd.f32 %v1279, %v1280
    %v1282 = vsel %vm75, %v1247, 0.0
    %v1283 = vadd.f32 %v1281, %v1282
    %v1284 = vsel %vm75, %v1248, 0.0
    %v1285 = vadd.f32 %v1283, %v1284
    %v1286 = vsel %vm75, %v1249, 0.0
    %v1287 = vadd.f32 %v1285, %v1286
    %v1288 = vsel %vm75, %v1250, 0.0
    %v1289 = vadd.f32 %v1287, %v1288
    %v1290 = vsel %vm75, %v1251, 0.0
    %v1291 = vadd.f32 %v1289, %v1290
    %v1292 = vsel %vm75, %v1252, 0.0
    %v1293 = vadd.f32 %v1291, %v1292
    %v1294 = vsel %vm75, %v1253, 0.0
    %v1295 = vadd.f32 %v1293, %v1294
    %v1296 = vsel %vm75, %v1254, 0.0
    %v1297 = vadd.f32 %v1295, %v1296
    %v1298 = vsel %vm75, %v1255, 0.0
    %v1299 = vadd.f32 %v1297, %v1298
    %v1300 = vsel %vm75, %v1256, 0.0
    %v1301 = vadd.f32 %v1299, %v1300
    %v1302 = vsel %vm75, %v1257, 0.0
    %v1303 = vadd.f32 %v1301, %v1302
    %v1304 = vsel %vm75, %v1258, 0.0
    %v1305 = vadd.f32 %v1303, %v1304
    %v1306 = vrot.slane %v1305, 4
    %v1307 = vadd.f32 %v1305, %v1306
    %v1308 = vrot.slane %v1307, 2
    %v1309 = vadd.f32 %v1307, %v1308
    %v1310 = vrot.slane %v1309, 1
    %v1311 = vadd.f32 %v1309, %v1310
    %v1312 = vsel %vm75, %v1259, 0.0
    %v1313 = vsel %vm75, %v1260, 0.0
    %v1314 = vadd.f32 %v1312, %v1313
    %v1315 = vsel %vm75, %v1261, 0.0
    %v1316 = vadd.f32 %v1314, %v1315
    %v1317 = vsel %vm75, %v1262, 0.0
    %v1318 = vadd.f32 %v1316, %v1317
    %v1319 = vsel %vm75, %v1263, 0.0
    %v1320 = vadd.f32 %v1318, %v1319
    %v1321 = vsel %vm75, %v1264, 0.0
    %v1322 = vadd.f32 %v1320, %v1321
    %v1323 = vsel %vm75, %v1265, 0.0
    %v1324 = vadd.f32 %v1322, %v1323
    %v1325 = vsel %vm75, %v1266, 0.0
    %v1326 = vadd.f32 %v1324, %v1325
    %v1327 = vsel %vm75, %v1267, 0.0
    %v1328 = vadd.f32 %v1326, %v1327
    %v1329 = vsel %vm75, %v1268, 0.0
    %v1330 = vadd.f32 %v1328, %v1329
    %v1331 = vsel %vm75, %v1269, 0.0
    %v1332 = vadd.f32 %v1330, %v1331
    %v1333 = vsel %vm75, %v1270, 0.0
    %v1334 = vadd.f32 %v1332, %v1333
    %v1335 = vsel %vm75, %v1271, 0.0
    %v1336 = vadd.f32 %v1334, %v1335
    %v1337 = vsel %vm75, %v1272, 0.0
    %v1338 = vadd.f32 %v1336, %v1337
    %v1339 = vsel %vm75, %v1273, 0.0
    %v1340 = vadd.f32 %v1338, %v1339
    %v1341 = vsel %vm75, %v1274, 0.0
    %v1342 = vadd.f32 %v1340, %v1341
    %v1343 = vrot.slane %v1342, 4
    %v1344 = vadd.f32 %v1342, %v1343
    %v1345 = vrot.slane %v1344, 2
    %v1346 = vadd.f32 %v1344, %v1345
    %v1347 = vrot.slane %v1346, 1
    %v1348 = vadd.f32 %v1346, %v1347
    %v1351 = vsel %vm999, %v1348, %v1311
    %vm1353 = vcmask 517120
    %1354 = vst.msk [vmem:[#allocation2] sm:$0x3] %vm1353, %v1351
    // Predicated region
    $region38: #{tpu_custom_call.1} parent=1 // pred_check
      _
    $region39: #{tpu_custom_call.1} parent=1 // pred_check_branch
      %1356 = sbr.rel (0) target = $region41
    $region40: #{tpu_custom_call.1} parent=1 // pred_region
      %1358 = vsyncadd [#allocation3], 0
      %s1360 = sshll.u32 [#allocation2], 4
      %s1361 = int_to_ptr.vmem [resolvable:$true] %s1360
      %s1362 = sshll.u32 %s9, 4
      %s1363 = int_to_ptr.hbm [resolvable:$true] %s1362
      %1365 = dma.vmem_to_hbm [thread:$0]  %s1361, 32, %s1363, [#allocation3]
    $region41: #{tpu_custom_call.1} parent=1 // pred_fallthru
      _
    // Predicated region
    $region42: #{tpu_custom_call.1} parent=1 // pred_check
      _
    $region43: #{tpu_custom_call.1} parent=1 // pred_check_branch
      %1367 = sbr.rel (0) target = $region45
    $region44: #{tpu_custom_call.1} parent=1 // pred_region
      %1369 = vsyncadd [#allocation5], 0
      %s1371 = sshll.u32 [#allocation4], 4
      %s1372 = int_to_ptr.vmem [resolvable:$true] %s1371
      %s1373 = sshll.u32 %s10, 4
      %s1374 = int_to_ptr.hbm [resolvable:$true] %s1373
      %1376 = dma.vmem_to_hbm [thread:$0]  %s1372, 32, %s1374, [#allocation5]
    $region45: #{tpu_custom_call.1} parent=1 // pred_fallthru
      _
    // Predicated region
    $region46: #{tpu_custom_call.1} parent=1 // pred_check
      _
    $region47: #{tpu_custom_call.1} parent=1 // pred_check_branch
      %1378 = sbr.rel (0) target = $region49
    $region48: #{tpu_custom_call.1} parent=1 // pred_region
      %1380 = vsyncadd [#allocation5], 0
      %s1382 = sshll.u32 [#allocation6], 4
      %s1383 = int_to_ptr.vmem [resolvable:$true] %s1382
      %s1384 = sshll.u32 %s11, 4
      %s1385 = int_to_ptr.hbm [resolvable:$true] %s1384
      %1387 = dma.vmem_to_hbm [thread:$0]  %s1383, 32, %s1385, [#allocation5]
    $region49: #{tpu_custom_call.1} parent=1 // pred_fallthru
      _
    // Predicated region
    $region50: #{tpu_custom_call.1} parent=1 // pred_check
      _
    $region51: #{tpu_custom_call.1} parent=1 // pred_check_branch
      %1389 = sbr.rel (0) target = $region53
    $region52: #{tpu_custom_call.1} parent=1 // pred_region
      %1391 = dma.done [#allocation3], 32
    $region53: #{tpu_custom_call.1} parent=1 // pred_fallthru
      _
    // Predicated region
    $region54: #{tpu_custom_call.1} parent=1 // pred_check
      _
    $region55: #{tpu_custom_call.1} parent=1 // pred_check_branch
      %1393 = sbr.rel (0) target = $region57
    $region56: #{tpu_custom_call.1} parent=1 // pred_region
      %1395 = dma.done [#allocation5], 32
    $region57: #{tpu_custom_call.1} parent=1 // pred_fallthru
      _
    // Predicated region
    $region58: #{tpu_custom_call.1} parent=1 // pred_check
      _
    $region59: #{tpu_custom_call.1} parent=1 // pred_check_branch
      %1397 = sbr.rel (0) target = $region61
    $region60: #{tpu_custom_call.1} parent=1 // pred_region
      %1399 = dma.done [#allocation5], 32
    $region61: #{tpu_custom_call.1} parent=1 // pred_fallthru
      _
    %1400 = vsyncpa [#allocation3], 1
    %1401 = vsyncpa [#allocation5], 1

</llo_original>
